<compile_context>
chip_gen: v5e
topology: v5e:2x2
jax: 0.10.0
libtpu: 0.0.40
codegen_flags: <defaults>
</compile_context>

<pallas_src>
import jax
import jax.numpy as jnp
from jax import lax
from jax.experimental import pallas as pl
from jax.experimental.pallas import tpu as pltpu

IN_CHANS = 4
OUT_CHANS = (48, 96, 192)
BN_EPS = 1e-5


def _round_up(x, m):
    return ((x + m - 1) // m) * m


# ---------------------------------------------------------------------------
# Kernel: fused (im2col'd conv) GEMM + folded-BN shift + ReLU
# ---------------------------------------------------------------------------
def _conv_bn_relu_kernel(x_ref, w_ref, shift_ref, o_ref):
    # x_ref: (tm, Kg) bf16, w_ref: (Kg, Ng) bf16 (BN scale pre-folded),
    # shift_ref: (1, Ng) f32, o_ref: (tm, Ng) bf16.
    acc = jnp.dot(x_ref[...], w_ref[...], preferred_element_type=jnp.float32)
    o_ref[...] = jnp.maximum(acc + shift_ref[...], 0.0).astype(o_ref.dtype)


def _pick_tm(m_rows, k_cols):
    """Row tile: ~2 MiB of bf16 LHS per grid step; >=2 grid blocks when possible."""
    if m_rows <= 8:
        return m_rows
    tm = _round_up(max(8, (2 << 20) // (2 * k_cols)), 8)
    tm = min(tm, _round_up(pl.cdiv(m_rows, 2), 8))   # keep both v7x TensorCores busy
    tm = min(tm, _round_up(m_rows, 8))
    return max(tm, 8)


def _conv_bn_relu_gemm(lhs_bf16, w_bf16, shift_f32):
    """lhs: (Mg, Kg) bf16, w: (Kg, Ng) bf16, shift: (1, Ng) f32 -> (Mg, Ng) bf16."""
    Mg, Kg = lhs_bf16.shape
    Kw, Ng = w_bf16.shape
    assert Kg == Kw and shift_f32.shape == (1, Ng)
    tm = _pick_tm(Mg, Kg)
    grid = (pl.cdiv(Mg, tm),)   # ragged tail is fine: no reduction over rows

    cost = pl.CostEstimate(
        flops=2 * Mg * Kg * Ng,
        transcendentals=0,
        bytes_accessed=Mg * Kg * 2 + Kg * Ng * 2 + Ng * 4 + Mg * Ng * 2,
    )

    return pl.pallas_call(
        _conv_bn_relu_kernel,
        out_shape=jax.ShapeDtypeStruct((Mg, Ng), jnp.bfloat16),
        grid_spec=pltpu.PrefetchScalarGridSpec(
            num_scalar_prefetch=0,
            grid=grid,
            in_specs=[
                pl.BlockSpec((tm, Kg), lambda i: (i, 0)),
                pl.BlockSpec((Kg, Ng), lambda i: (0, 0)),   # weights resident across grid
                pl.BlockSpec((1, Ng), lambda i: (0, 0)),
            ],
            out_specs=pl.BlockSpec((tm, Ng), lambda i: (i, 0)),
        ),
        compiler_params=pltpu.CompilerParams(
            dimension_semantics=("parallel",),
            vmem_limit_bytes=32 * 1024 * 1024,
        ),
        cost_estimate=cost,
    )(lhs_bf16, w_bf16, shift_f32)


# ---------------------------------------------------------------------------
# Wrapper-side layout plumbing
# ---------------------------------------------------------------------------
def _im2col_s2(x):
    """NHWC 3x3 / stride-2 / pad-1 im2col (stays in bf16; layout plumbing only)."""
    B, H, W, C = x.shape
    Ho = (H - 1) // 2 + 1
    Wo = (W - 1) // 2 + 1
    xp = jnp.pad(x, ((0, 0), (1, 1), (1, 1), (0, 0)))
    taps = []
    for dy in range(3):
        for dx in range(3):
            taps.append(xp[:, dy:dy + 2 * Ho - 1:2, dx:dx + 2 * Wo - 1:2, :])
    cols = jnp.concatenate(taps, axis=-1)                    # (B, Ho, Wo, 9*C)
    return cols.reshape(B * Ho * Wo, 9 * C), (B, Ho, Wo)


def _pick_group(m_rows, k_cols, n_out):
    """Fuse g output pixels per GEMM row (block-diagonal weights) so the store
    width g*n_out is a multiple of 128 (unmasked lane-dense stores). Enabled only
    if the g-fold MXU-flop inflation keeps the layer memory-bound on all gens."""
    for g in (1, 2, 4, 8, 16):
        if m_rows % g or (g * n_out) % 128:
            continue
        if g * k_cols * n_out / (k_cols + n_out) <= 220.0:   # below v5e ridge (~240 fl/B)
            return g
        break
    return 1


def conv_stream_pallas(x_nchw, layer_params):
    """ConvStream forward. x_nchw: (B, Cin, H, W) f32. Returns [x, d1, d2, d3] NCHW f32."""
    outs = [x_nchw]
    cur = jnp.transpose(x_nchw, (0, 2, 3, 1)).astype(jnp.bfloat16)   # NHWC, bf16 activations
    for w2d, shift in layer_params:
        cols, (B, Ho, Wo) = _im2col_s2(cur)                  # (M, 9*Cin) bf16
        M, K = cols.shape
        n_out = w2d.shape[1]
        g = _pick_group(M, K, n_out)
        lhs = cols.reshape(M // g, g * K)                    # row-major regroup: free
        w_bd = jnp.kron(jnp.eye(g, dtype=w2d.dtype), w2d).astype(jnp.bfloat16)
        shift_g = jnp.tile(shift.reshape(1, n_out), (1, g)).astype(jnp.float32)
        y = _conv_bn_relu_gemm(lhs, w_bd, shift_g)           # (M//g, g*n_out) bf16
        cur = y.reshape(B, Ho, Wo, n_out)                    # bf16 feeds next layer
        outs.append(jnp.transpose(cur, (0, 3, 1, 2)).astype(jnp.float32))
    return outs


# ---------------------------------------------------------------------------
# Parameters (deterministic) + BN folding
# ---------------------------------------------------------------------------
def _init_raw_params(key):
    """Per layer: conv weight (HWIO) + BatchNorm (gamma, beta, running_mean, running_var)."""
    chans = (IN_CHANS,) + OUT_CHANS
    params = []
    for i in range(len(chans) - 1):
        cin, cout = chans[i], chans[i + 1]
        key, kw, kg, kb, km, kv = jax.random.split(key, 6)
        bound = 1.0 / (9 * cin) ** 0.5      # torch Conv2d kaiming_uniform(a=sqrt(5)) bound
        w = jax.random.uniform(kw, (3, 3, cin, cout), jnp.float32, -bound, bound)
        gamma = jax.random.uniform(kg, (cout,), jnp.float32, 0.5, 1.5)
        beta = 0.1 * jax.random.normal(kb, (cout,), jnp.float32)
        mean = 0.1 * jax.random.normal(km, (cout,), jnp.float32)
        var = jax.random.uniform(kv, (cout,), jnp.float32, 0.5, 1.5)
        params.append((w, gamma, beta, mean, var))
    return params


def _fold_layer(w_hwio, gamma, beta, mean, var):
    """Fold inference BatchNorm: scale into the weights, keep only a shift."""
    kh, kw, cin, cout = w_hwio.shape
    inv_std = gamma / jnp.sqrt(var + BN_EPS)
    w2d = (w_hwio.reshape(kh * kw * cin, cout) * inv_std[None, :]).astype(jnp.float32)
    shift = (beta - mean * inv_std).astype(jnp.float32)
    return w2d, shift


# ---------------------------------------------------------------------------
# Pure-JAX reference (f32, lax conv) for correctness check
# ---------------------------------------------------------------------------
def _conv_stream_ref(x_nchw, raw_params):
    outs = [x_nchw]
    cur = jnp.transpose(x_nchw, (0, 2, 3, 1))
    for w, gamma, beta, mean, var in raw_params:
        y = lax.conv_general_dilated(
            cur, w, window_strides=(2, 2), padding=((1, 1), (1, 1)),
            dimension_numbers=("NHWC", "HWIO", "NHWC"))
        scale = gamma / jnp.sqrt(var + BN_EPS)
        y = y * scale + (beta - mean * scale)
        cur = jnp.maximum(y, 0.0)
        outs.append(jnp.transpose(cur, (0, 3, 1, 2)))
    return outs


if __name__ == "__main__":
    key = jax.random.PRNGKey(0)
    kx, kp = jax.random.split(key)

    B, C, H, W = 2, 4, 16, 16
    x = jax.random.normal(kx, (B, C, H, W), dtype=jnp.float32)

    raw = _init_raw_params(kp)
    fused = [_fold_layer(*p) for p in raw]

    run = jax.jit(conv_stream_pallas)
    outs = jax.block_until_ready(run(x, fused))

    refs = _conv_stream_ref(x, raw)

    expected_shapes = [(B, C, H, W),
                       (B, 48, H // 2, W // 2),
                       (B, 96, H // 4, W // 4),
                       (B, 192, H // 8, W // 8)]
    assert len(outs) == 4
    for o, r, s in zip(outs, refs, expected_shapes):
        assert o.shape == s and r.shape == s
        # bf16 matmul operands + bf16 chained activations (f32 accumulation)
        assert jnp.allclose(o, r, atol=6e-2, rtol=6e-2), float(jnp.abs(o - r).max())

    print("KERNEL_OK")
</pallas_src>

<mosaic_0001>
module attributes {stable_mosaic.version = 11 : i64} {
  func.func @_conv_bn_relu_kernel(%arg0: i32, %arg1: memref<8x288xbf16, #tpu.memory_space<vmem>>, %arg2: memref<288x384xbf16, #tpu.memory_space<vmem>>, %arg3: memref<1x384xf32, #tpu.memory_space<vmem>>, %arg4: memref<8x384xbf16, #tpu.memory_space<vmem>>) attributes {dimension_semantics = [#tpu.dimension_semantics<parallel>], iteration_bounds = array<i64: 2>, scalar_prefetch = 0 : i64, scratch_operands = 0 : i64, tpu.core_type = #tpu.core_type<tc>, window_params = [{transform_indices = @transform_0, window_bounds = array<i64: 8, 288>}, {pipeline_mode = #tpu.pipeline_mode<synchronous>, transform_indices = @transform_1, window_bounds = array<i64: 288, 384>}, {pipeline_mode = #tpu.pipeline_mode<synchronous>, transform_indices = @transform_2, window_bounds = array<i64: 1, 384>}, {transform_indices = @transform_3, window_bounds = array<i64: 8, 384>}]} {
    %c0 = arith.constant 0 : index
    %c0_0 = arith.constant 0 : index
    %0 = vector.load %arg1[%c0, %c0_0] : memref<8x288xbf16, #tpu.memory_space<vmem>>, vector<8x288xbf16>
    %c0_1 = arith.constant 0 : index
    %c0_2 = arith.constant 0 : index
    %1 = vector.load %arg2[%c0_1, %c0_2] : memref<288x384xbf16, #tpu.memory_space<vmem>>, vector<288x384xbf16>
    %cst = arith.constant dense<0.000000e+00> : vector<8x384xf32>
    %2 = tpu.matmul %0, %1, %cst {dimension_numbers = #tpu.dot_dimension_numbers<[1], [0], [0], [1], [0, 0, 1, 1], [], []>} : vector<8x288xbf16>, vector<288x384xbf16>, vector<8x384xf32> -> vector<8x384xf32>
    %c0_3 = arith.constant 0 : index
    %c0_4 = arith.constant 0 : index
    %3 = vector.load %arg3[%c0_3, %c0_4] : memref<1x384xf32, #tpu.memory_space<vmem>>, vector<1x384xf32>
    %4 = vector.broadcast %3 : vector<1x384xf32> to vector<8x384xf32>
    %5 = arith.addf %2, %4 : vector<8x384xf32>
    %cst_5 = arith.constant 0.000000e+00 : f32
    %6 = vector.broadcast %cst_5 : f32 to vector<8x384xf32>
    %7 = arith.maximumf %5, %6 : vector<8x384xf32>
    %8 = arith.truncf %7 : vector<8x384xf32> to vector<8x384xbf16>
    %c0_6 = arith.constant 0 : index
    %c0_7 = arith.constant 0 : index
    %9 = vector.load %arg4[%c0_6, %c0_7] : memref<8x384xbf16, #tpu.memory_space<vmem>>, vector<8x384xbf16>
    tpu.vector_store %arg4[%c0_6, %c0_7], %8 {strides = array<i32>} : memref<8x384xbf16, #tpu.memory_space<vmem>>, vector<8x384xbf16>,
    return
  }
  func.func @transform_0(%arg0: i32) -> (i32, i32) {
    %c0_i32 = arith.constant 0 : i32
    %c0_i32_0 = arith.constant 0 : i32
    return %arg0, %c0_i32 : i32, i32
  }
  func.func @transform_1(%arg0: i32) -> (i32, i32) {
    %c0_i32 = arith.constant 0 : i32
    %c0_i32_0 = arith.constant 0 : i32
    %c0_i32_1 = arith.constant 0 : i32
    return %c0_i32, %c0_i32_0 : i32, i32
  }
  func.func @transform_2(%arg0: i32) -> (i32, i32) {
    %c0_i32 = arith.constant 0 : i32
    %c0_i32_0 = arith.constant 0 : i32
    %c0_i32_1 = arith.constant 0 : i32
    return %c0_i32, %c0_i32_0 : i32, i32
  }
  func.func @transform_3(%arg0: i32) -> (i32, i32) {
    %c0_i32 = arith.constant 0 : i32
    %c0_i32_0 = arith.constant 0 : i32
    return %arg0, %c0_i32 : i32, i32
  }
}

module attributes {stable_mosaic.version = 11 : i64} {
  func.func @_conv_bn_relu_kernel(%arg0: i32, %arg1: memref<16x432xbf16, #tpu.memory_space<vmem>>, %arg2: memref<432x96xbf16, #tpu.memory_space<vmem>>, %arg3: memref<1x96xf32, #tpu.memory_space<vmem>>, %arg4: memref<16x96xbf16, #tpu.memory_space<vmem>>) attributes {dimension_semantics = [#tpu.dimension_semantics<parallel>], iteration_bounds = array<i64: 2>, scalar_prefetch = 0 : i64, scratch_operands = 0 : i64, tpu.core_type = #tpu.core_type<tc>, window_params = [{transform_indices = @transform_0, window_bounds = array<i64: 16, 432>}, {pipeline_mode = #tpu.pipeline_mode<synchronous>, transform_indices = @transform_1, window_bounds = array<i64: 432, 96>}, {pipeline_mode = #tpu.pipeline_mode<synchronous>, transform_indices = @transform_2, window_bounds = array<i64: 1, 96>}, {transform_indices = @transform_3, window_bounds = array<i64: 16, 96>}]} {
    %c0 = arith.constant 0 : index
    %c0_0 = arith.constant 0 : index
    %0 = vector.load %arg1[%c0, %c0_0] : memref<16x432xbf16, #tpu.memory_space<vmem>>, vector<16x432xbf16>
    %c0_1 = arith.constant 0 : index
    %c0_2 = arith.constant 0 : index
    %1 = vector.load %arg2[%c0_1, %c0_2] : memref<432x96xbf16, #tpu.memory_space<vmem>>, vector<432x96xbf16>
    %cst = arith.constant dense<0.000000e+00> : vector<16x96xf32>
    %2 = tpu.matmul %0, %1, %cst {dimension_numbers = #tpu.dot_dimension_numbers<[1], [0], [0], [1], [0, 0, 1, 1], [], []>} : vector<16x432xbf16>, vector<432x96xbf16>, vector<16x96xf32> -> vector<16x96xf32>
    %c0_3 = arith.constant 0 : index
    %c0_4 = arith.constant 0 : index
    %3 = vector.load %arg3[%c0_3, %c0_4] : memref<1x96xf32, #tpu.memory_space<vmem>>, vector<1x96xf32>
    %4 = vector.broadcast %3 : vector<1x96xf32> to vector<16x96xf32>
    %5 = arith.addf %2, %4 : vector<16x96xf32>
    %cst_5 = arith.constant 0.000000e+00 : f32
    %6 = vector.broadcast %cst_5 : f32 to vector<16x96xf32>
    %7 = arith.maximumf %5, %6 : vector<16x96xf32>
    %8 = arith.truncf %7 : vector<16x96xf32> to vector<16x96xbf16>
    %c0_6 = arith.constant 0 : index
    %c0_7 = arith.constant 0 : index
    %9 = vector.load %arg4[%c0_6, %c0_7] : memref<16x96xbf16, #tpu.memory_space<vmem>>, vector<16x96xbf16>
    tpu.vector_store %arg4[%c0_6, %c0_7], %8 {strides = array<i32>} : memref<16x96xbf16, #tpu.memory_space<vmem>>, vector<16x96xbf16>,
    return
  }
  func.func @transform_0(%arg0: i32) -> (i32, i32) {
    %c0_i32 = arith.constant 0 : i32
    %c0_i32_0 = arith.constant 0 : i32
    return %arg0, %c0_i32 : i32, i32
  }
  func.func @transform_1(%arg0: i32) -> (i32, i32) {
    %c0_i32 = arith.constant 0 : i32
    %c0_i32_0 = arith.constant 0 : i32
    %c0_i32_1 = arith.constant 0 : i32
    return %c0_i32, %c0_i32_0 : i32, i32
  }
  func.func @transform_2(%arg0: i32) -> (i32, i32) {
    %c0_i32 = arith.constant 0 : i32
    %c0_i32_0 = arith.constant 0 : i32
    %c0_i32_1 = arith.constant 0 : i32
    return %c0_i32, %c0_i32_0 : i32, i32
  }
  func.func @transform_3(%arg0: i32) -> (i32, i32) {
    %c0_i32 = arith.constant 0 : i32
    %c0_i32_0 = arith.constant 0 : i32
    return %arg0, %c0_i32 : i32, i32
  }
}

module attributes {stable_mosaic.version = 11 : i64} {
  func.func @_conv_bn_relu_kernel(%arg0: i32, %arg1: memref<8x864xbf16, #tpu.memory_space<vmem>>, %arg2: memref<864x192xbf16, #tpu.memory_space<vmem>>, %arg3: memref<1x192xf32, #tpu.memory_space<vmem>>, %arg4: memref<8x192xbf16, #tpu.memory_space<vmem>>) attributes {dimension_semantics = [#tpu.dimension_semantics<parallel>], iteration_bounds = array<i64: 1>, scalar_prefetch = 0 : i64, scratch_operands = 0 : i64, tpu.core_type = #tpu.core_type<tc>, window_params = [{transform_indices = @transform_0, window_bounds = array<i64: 8, 864>}, {pipeline_mode = #tpu.pipeline_mode<synchronous>, transform_indices = @transform_1, window_bounds = array<i64: 864, 192>}, {pipeline_mode = #tpu.pipeline_mode<synchronous>, transform_indices = @transform_2, window_bounds = array<i64: 1, 192>}, {transform_indices = @transform_3, window_bounds = array<i64: 8, 192>}]} {
    %c0 = arith.constant 0 : index
    %c0_0 = arith.constant 0 : index
    %0 = vector.load %arg1[%c0, %c0_0] : memref<8x864xbf16, #tpu.memory_space<vmem>>, vector<8x864xbf16>
    %c0_1 = arith.constant 0 : index
    %c0_2 = arith.constant 0 : index
    %1 = vector.load %arg2[%c0_1, %c0_2] : memref<864x192xbf16, #tpu.memory_space<vmem>>, vector<864x192xbf16>
    %cst = arith.constant dense<0.000000e+00> : vector<8x192xf32>
    %2 = tpu.matmul %0, %1, %cst {dimension_numbers = #tpu.dot_dimension_numbers<[1], [0], [0], [1], [0, 0, 1, 1], [], []>} : vector<8x864xbf16>, vector<864x192xbf16>, vector<8x192xf32> -> vector<8x192xf32>
    %c0_3 = arith.constant 0 : index
    %c0_4 = arith.constant 0 : index
    %3 = vector.load %arg3[%c0_3, %c0_4] : memref<1x192xf32, #tpu.memory_space<vmem>>, vector<1x192xf32>
    %4 = vector.broadcast %3 : vector<1x192xf32> to vector<8x192xf32>
    %5 = arith.addf %2, %4 : vector<8x192xf32>
    %cst_5 = arith.constant 0.000000e+00 : f32
    %6 = vector.broadcast %cst_5 : f32 to vector<8x192xf32>
    %7 = arith.maximumf %5, %6 : vector<8x192xf32>
    %8 = arith.truncf %7 : vector<8x192xf32> to vector<8x192xbf16>
    %c0_6 = arith.constant 0 : index
    %c0_7 = arith.constant 0 : index
    %9 = vector.load %arg4[%c0_6, %c0_7] : memref<8x192xbf16, #tpu.memory_space<vmem>>, vector<8x192xbf16>
    tpu.vector_store %arg4[%c0_6, %c0_7], %8 {strides = array<i32>} : memref<8x192xbf16, #tpu.memory_space<vmem>>, vector<8x192xbf16>,
    return
  }
  func.func @transform_0(%arg0: i32) -> (i32, i32) {
    %c0_i32 = arith.constant 0 : i32
    %c0_i32_0 = arith.constant 0 : i32
    return %arg0, %c0_i32 : i32, i32
  }
  func.func @transform_1(%arg0: i32) -> (i32, i32) {
    %c0_i32 = arith.constant 0 : i32
    %c0_i32_0 = arith.constant 0 : i32
    %c0_i32_1 = arith.constant 0 : i32
    return %c0_i32, %c0_i32_0 : i32, i32
  }
  func.func @transform_2(%arg0: i32) -> (i32, i32) {
    %c0_i32 = arith.constant 0 : i32
    %c0_i32_0 = arith.constant 0 : i32
    %c0_i32_1 = arith.constant 0 : i32
    return %c0_i32, %c0_i32_0 : i32, i32
  }
  func.func @transform_3(%arg0: i32) -> (i32, i32) {
    %c0_i32 = arith.constant 0 : i32
    %c0_i32_0 = arith.constant 0 : i32
    return %arg0, %c0_i32 : i32, i32
  }
}

</mosaic_0001>

<llo_original>
// kernel: conv_stream_pallas.3
$region0: #{conv_stream_pallas.3}
  #allocation0 [shape = 'u32[]', space=smem, size = 0x4, offset = 0x4, fixed_abs, tag = 'smem constant byte address 0x4 - core index']
  #allocation1 [shape = 'u32[72,128]{1,0:T(1,128)}', space=vmem, size = 0x9000, scoped, tag = 'internal scratch']
  %s0 = inlined_call_operand.vmem [shape: bf16[16,288], index: 0, kind: input, shape index: {}]
  %s1 = inlined_call_operand.vmem [shape: bf16[288,384], index: 1, kind: input, shape index: {}]
  %s2 = inlined_call_operand.vmem [shape: f32[1,384], index: 2, kind: input, shape index: {}]
  %s3 = inlined_call_operand.vmem [shape: bf16[16,384], index: 3, kind: output, shape index: {}]
  %s4 = sld [smem:[#allocation0]]
  $region45: #{conv_stream_pallas.3} parent=0
    _
  %s6 = ssub.s32 1, %s4
  %s7 = scalar_select 0, %s6, %s4
  loop: start=0, step=1, limit=4
  $region2: #{conv_stream_pallas.3} parent=0 // loop_pre_header
    _
  $region3: #{conv_stream_pallas.3} parent=0 // loop_header
    %s9 = sphi 0, %s13
    %p10 = scmp.ge.s32.totalorder %s9, 4
    %s19 = sphi 0, %s21
    %s22 = sphi 0, %s19
    %s23 = sphi 0, %s22
    %s39 = sphi 0, %s23
    %s43 = sphi 0, %s43
    %s45 = sphi 0, %s43
    %s46 = sphi 0, %s45
    %s60 = sphi 0, %s46
    %s64 = sphi 0, %s64
    %s66 = sphi 0, %s64
    %s67 = sphi 0, %s66
    %s81 = sphi 0, %s67
    %s87 = sphi 0, %s89
    %s90 = sphi 0, %s87
    %s91 = sphi 0, %s90
    %s107 = sphi 0, %s91
  $region4: #{conv_stream_pallas.3} parent=0 // loop_header_branch
    %12 = sbr.rel (%p10) target = $region8
  $region5: #{conv_stream_pallas.3} parent=0 // loop_body
    %s14 = ssub.s32 %s9, 1
    %s15 = ssub.s32 %s9, 2
    %s16 = sadd.s32 %s9, 1
    %s17 = ssub.s32 %s9, %s16
    %p18 = scmp.eq.s32.totalorder %s17, 0
    %s20 = sadd.s32 %s19, 1
    %s21 = scalar_select %p18, %s19, %s20
    %p24 = pneg %p18
    %p25 = scmp.eq.s32.totalorder %s9, 1
    %p26 = por %p24, %p25
    %p27 = scmp.ne.s32.totalorder %s19, %s22
    %p28 = scmp.eq.s32.totalorder %s9, 0
    %p29 = por %p27, %p28
    %p30 = scmp.ne.s32.totalorder %s19, %s22
    %p31 = scmp.eq.s32.totalorder %s14, 1
    %p32 = por %p30, %p31
    %p33 = scmp.ne.s32.totalorder %s22, %s23
    %p34 = scmp.eq.s32.totalorder %s14, 0
    %p35 = por %p33, %p34
    %p36 = scmp.ne.s32.totalorder %s22, %s23
    %p37 = scmp.eq.s32.totalorder %s15, 1
    %p38 = por %p36, %p37
    %p40 = scmp.ne.s32.totalorder %s23, %s39
    %p41 = scmp.eq.s32.totalorder %s15, 0
    %p42 = por %p40, %p41
    %s44 = sadd.s32 %s43, 1
    %p47 = scmp.eq.s32.totalorder %s9, 1
    %p48 = scmp.ne.s32.totalorder %s43, %s45
    %p49 = scmp.eq.s32.totalorder %s9, 0
    %p50 = por %p48, %p49
    %p51 = scmp.ne.s32.totalorder %s43, %s45
    %p52 = scmp.eq.s32.totalorder %s14, 1
    %p53 = por %p51, %p52
    %p54 = scmp.ne.s32.totalorder %s45, %s46
    %p55 = scmp.eq.s32.totalorder %s14, 0
    %p56 = por %p54, %p55
    %p57 = scmp.ne.s32.totalorder %s45, %s46
    %p58 = scmp.eq.s32.totalorder %s15, 1
    %p59 = por %p57, %p58
    %p61 = scmp.ne.s32.totalorder %s46, %s60
    %p62 = scmp.eq.s32.totalorder %s15, 0
    %p63 = por %p61, %p62
    %s65 = sadd.s32 %s64, 1
    %p68 = scmp.eq.s32.totalorder %s9, 1
    %p69 = scmp.ne.s32.totalorder %s64, %s66
    %p70 = scmp.eq.s32.totalorder %s9, 0
    %p71 = por %p69, %p70
    %p72 = scmp.ne.s32.totalorder %s64, %s66
    %p73 = scmp.eq.s32.totalorder %s14, 1
    %p74 = por %p72, %p73
    %p75 = scmp.ne.s32.totalorder %s66, %s67
    %p76 = scmp.eq.s32.totalorder %s14, 0
    %p77 = por %p75, %p76
    %p78 = scmp.ne.s32.totalorder %s66, %s67
    %p79 = scmp.eq.s32.totalorder %s15, 1
    %p80 = por %p78, %p79
    %p82 = scmp.ne.s32.totalorder %s67, %s81
    %p83 = scmp.eq.s32.totalorder %s15, 0
    %p84 = por %p82, %p83
    %s85 = ssub.s32 %s9, %s16
    %p86 = scmp.eq.s32.totalorder %s85, 0
    %s88 = sadd.s32 %s87, 1
    %s89 = scalar_select %p86, %s87, %s88
    %p92 = pneg %p86
    %p93 = scmp.eq.s32.totalorder %s9, 1
    %p94 = por %p92, %p93
    %p95 = scmp.ne.s32.totalorder %s87, %s90
    %p96 = scmp.eq.s32.totalorder %s9, 0
    %p97 = por %p95, %p96
    %p98 = scmp.ne.s32.totalorder %s87, %s90
    %p99 = scmp.eq.s32.totalorder %s14, 1
    %p100 = por %p98, %p99
    %p101 = scmp.ne.s32.totalorder %s90, %s91
    %p102 = scmp.eq.s32.totalorder %s14, 0
    %p103 = por %p101, %p102
    %p104 = scmp.ne.s32.totalorder %s90, %s91
    %p105 = scmp.eq.s32.totalorder %s15, 1
    %p106 = por %p104, %p105
    %p108 = scmp.ne.s32.totalorder %s91, %s107
    %p109 = scmp.eq.s32.totalorder %s15, 0
    %p110 = por %p108, %p109
    %p111 = scmp.le.s32.totalorder 1, %s9
    %p112 = scmp.lt.s32.totalorder %s9, 3
    %p113 = pnand %p111, %p112
    %p114 = pneg %p113
    // Predicated region
    $region9: #{conv_stream_pallas.3} parent=5 // pred_check
      _
    $region10: #{conv_stream_pallas.3} parent=5 // pred_check_branch
      %116 = sbr.rel (%p113) target = $region12
    $region11: #{conv_stream_pallas.3} parent=5 // pred_region
      %s117 = ssub.s32 %s9, 1
      // Predicated region
      $region13: #{conv_stream_pallas.3} parent=11 // pred_check
        %p118 = pneg %p56
      $region14: #{conv_stream_pallas.3} parent=11 // pred_check_branch
        %120 = sbr.rel (%p118) target = $region16
      $region15: #{conv_stream_pallas.3} parent=11 // pred_region
        _
      $region16: #{conv_stream_pallas.3} parent=11 // pred_fallthru
        _
      // Predicated region
      $region17: #{conv_stream_pallas.3} parent=11 // pred_check
        %p121 = pneg %p77
      $region18: #{conv_stream_pallas.3} parent=11 // pred_check_branch
        %123 = sbr.rel (%p121) target = $region20
      $region19: #{conv_stream_pallas.3} parent=11 // pred_region
        _
      $region20: #{conv_stream_pallas.3} parent=11 // pred_fallthru
        _
    $region12: #{conv_stream_pallas.3} parent=5 // pred_fallthru
      _
    %p124 = scmp.lt.s32.totalorder %s9, 2
    // Predicated region
    $region21: #{conv_stream_pallas.3} parent=5 // pred_check
      %p125 = pneg %p124
    $region22: #{conv_stream_pallas.3} parent=5 // pred_check_branch
      %127 = sbr.rel (%p125) target = $region24
    $region23: #{conv_stream_pallas.3} parent=5 // pred_region
      // Predicated region
      $region25: #{conv_stream_pallas.3} parent=23 // pred_check
        %p128 = pneg %p29
      $region26: #{conv_stream_pallas.3} parent=23 // pred_check_branch
        %130 = sbr.rel (%p128) target = $region28
      $region27: #{conv_stream_pallas.3} parent=23 // pred_region
        %p131 = scmp.lt.s32.totalorder %s9, 1
        %s132 = scalar_select %p131, %s9, 1
        %s133 = smul.addr %s132, 3
        %s134 = smul.addr %s133, 4
        %s135 = scalar_lea.vmem %s0, %s134
      $region28: #{conv_stream_pallas.3} parent=23 // pred_fallthru
        _
    $region24: #{conv_stream_pallas.3} parent=5 // pred_fallthru
      _
    %p136 = scmp.le.s32.totalorder 1, %s9
    %p137 = scmp.lt.s32.totalorder %s9, 3
    %p138 = pnand %p136, %p137
    %p139 = pneg %p138
    // Predicated region
    $region29: #{conv_stream_pallas.3} parent=5 // pred_check
      _
    $region30: #{conv_stream_pallas.3} parent=5 // pred_check_branch
      %141 = sbr.rel (%p138) target = $region32
    $region31: #{conv_stream_pallas.3} parent=5 // pred_region
      %s142 = ssub.s32 %s9, 1
      %p143 = scmp.lt.s32.totalorder %s14, 1
      %s144 = scalar_select %p143, %s14, 1
      %s145 = smul.addr %s144, 3
      %s146 = smul.addr %s145, 4
      %s147 = scalar_lea.vmem %s0, %s146
      %p148 = pneg %p35
      %p149 = pneg %p32
      %p150 = pneg %p56
      %p151 = pneg %p53
      %p152 = pneg %p77
      %p153 = pneg %p74
      %p154 = pneg %p103
      %p155 = pneg %p100
      %p156 = scmp.lt.s32.totalorder %s14, 1
      %s157 = scalar_select %p156, %s14, 1
      %s158 = smul.addr %s157, 3
      %s159 = smul.addr %s158, 4
      %s160 = scalar_lea.vmem %s3, %s159
      %p161 = scmp.lt.s32.totalorder %s14, 1
      %s162 = scalar_select %p161, %s14, 1
      %s163 = smul.addr %s162, 3
      %s164 = smul.addr %s163, 4
      %s165 = scalar_lea.vmem %s0, %s164
      %p166 = scmp.lt.s32.totalorder %s14, 1
      %s167 = scalar_select %p166, %s14, 1
      %s168 = smul.addr %s167, 3
      %s169 = smul.addr %s168, 4
      %s170 = scalar_lea.vmem %s3, %s169
      %v172 = vld [vmem:[%s165] sm:$0xff]
      %v173 = vld [vmem:[%s165 + $0x8] sm:$0xf]
      %v174 = vld [vmem:[%s1] sm:$0xff]
      %v175 = vld [vmem:[%s1 + $0x8] sm:$0xf]
      %v176 = vld [vmem:[%s1 + $0xc] sm:$0xff]
      %v177 = vld [vmem:[%s1 + $0x14] sm:$0xf]
      %v178 = vld [vmem:[%s1 + $0x18] sm:$0xff]
      %v179 = vld [vmem:[%s1 + $0x20] sm:$0xf]
      %v180 = vld [vmem:[%s1 + $0x24] sm:$0xff]
      %v181 = vld [vmem:[%s1 + $0x2c] sm:$0xf]
      %v182 = vld [vmem:[%s1 + $0x30] sm:$0xff]
      %v183 = vld [vmem:[%s1 + $0x38] sm:$0xf]
      %v184 = vld [vmem:[%s1 + $0x3c] sm:$0xff]
      %v185 = vld [vmem:[%s1 + $0x44] sm:$0xf]
      %v186 = vld [vmem:[%s1 + $0x48] sm:$0xff]
      %v187 = vld [vmem:[%s1 + $0x50] sm:$0xf]
      %v188 = vld [vmem:[%s1 + $0x54] sm:$0xff]
      %v189 = vld [vmem:[%s1 + $0x5c] sm:$0xf]
      %v190 = vld [vmem:[%s1 + $0x60] sm:$0xff]
      %v191 = vld [vmem:[%s1 + $0x68] sm:$0xf]
      %v192 = vld [vmem:[%s1 + $0x6c] sm:$0xff]
      %v193 = vld [vmem:[%s1 + $0x74] sm:$0xf]
      %v194 = vld [vmem:[%s1 + $0x78] sm:$0xff]
      %v195 = vld [vmem:[%s1 + $0x80] sm:$0xf]
      %v196 = vld [vmem:[%s1 + $0x84] sm:$0xff]
      %v197 = vld [vmem:[%s1 + $0x8c] sm:$0xf]
      %v198 = vld [vmem:[%s1 + $0x90] sm:$0xff]
      %v199 = vld [vmem:[%s1 + $0x98] sm:$0xf]
      %v200 = vld [vmem:[%s1 + $0x9c] sm:$0xff]
      %v201 = vld [vmem:[%s1 + $0xa4] sm:$0xf]
      %v202 = vld [vmem:[%s1 + $0xa8] sm:$0xff]
      %v203 = vld [vmem:[%s1 + $0xb0] sm:$0xf]
      %v204 = vld [vmem:[%s1 + $0xb4] sm:$0xff]
      %v205 = vld [vmem:[%s1 + $0xbc] sm:$0xf]
      %v206 = vld [vmem:[%s1 + $0xc0] sm:$0xff]
      %v207 = vld [vmem:[%s1 + $0xc8] sm:$0xf]
      %v208 = vld [vmem:[%s1 + $0xcc] sm:$0xff]
      %v209 = vld [vmem:[%s1 + $0xd4] sm:$0xf]
      %v210 = vld [vmem:[%s1 + $0xd8] sm:$0xff]
      %v211 = vld [vmem:[%s1 + $0xe0] sm:$0xf]
      %v212 = vld [vmem:[%s1 + $0xe4] sm:$0xff]
      %v213 = vld [vmem:[%s1 + $0xec] sm:$0xf]
      %v214 = vld [vmem:[%s1 + $0xf0] sm:$0xff]
      %v215 = vld [vmem:[%s1 + $0xf8] sm:$0xf]
      %v216 = vld [vmem:[%s1 + $0xfc] sm:$0xff]
      %v217 = vld [vmem:[%s1 + $0x104] sm:$0xf]
      %v218 = vld [vmem:[%s1 + $0x108] sm:$0xff]
      %v219 = vld [vmem:[%s1 + $0x110] sm:$0xf]
      %v220 = vld [vmem:[%s1 + $0x114] sm:$0xff]
      %v221 = vld [vmem:[%s1 + $0x11c] sm:$0xf]
      %v222 = vld [vmem:[%s1 + $0x120] sm:$0xff]
      %v223 = vld [vmem:[%s1 + $0x128] sm:$0xf]
      %v224 = vld [vmem:[%s1 + $0x12c] sm:$0xff]
      %v225 = vld [vmem:[%s1 + $0x134] sm:$0xf]
      %v226 = vld [vmem:[%s1 + $0x138] sm:$0xff]
      %v227 = vld [vmem:[%s1 + $0x140] sm:$0xf]
      %v228 = vld [vmem:[%s1 + $0x144] sm:$0xff]
      %v229 = vld [vmem:[%s1 + $0x14c] sm:$0xf]
      %v230 = vld [vmem:[%s1 + $0x150] sm:$0xff]
      %v231 = vld [vmem:[%s1 + $0x158] sm:$0xf]
      %v232 = vld [vmem:[%s1 + $0x15c] sm:$0xff]
      %v233 = vld [vmem:[%s1 + $0x164] sm:$0xf]
      %v234 = vld [vmem:[%s1 + $0x168] sm:$0xff]
      %v235 = vld [vmem:[%s1 + $0x170] sm:$0xf]
      %v236 = vld [vmem:[%s1 + $0x174] sm:$0xff]
      %v237 = vld [vmem:[%s1 + $0x17c] sm:$0xf]
      %v238 = vld [vmem:[%s1 + $0x180] sm:$0xff]
      %v239 = vld [vmem:[%s1 + $0x188] sm:$0xf]
      %v240 = vld [vmem:[%s1 + $0x18c] sm:$0xff]
      %v241 = vld [vmem:[%s1 + $0x194] sm:$0xf]
      %v242 = vld [vmem:[%s1 + $0x198] sm:$0xff]
      %v243 = vld [vmem:[%s1 + $0x1a0] sm:$0xf]
      %v244 = vld [vmem:[%s1 + $0x1a4] sm:$0xff]
      %v245 = vld [vmem:[%s1 + $0x1ac] sm:$0xf]
      %v246 = vld [vmem:[%s2] sm:$0x7]
      %v248 = vperm.slane %v246, 0
      %v249 = vperm.slane %v246, 1
      %v250 = vperm.slane %v246, 2
      %v256 = vunpack.c.l.b16 %v172
      %v257 = vunpack.c.h.b16 %v172
      %v258 = vunpack.c.l.b16 %v173
      %v259 = vpack.c.b16 %v256, %v256
      %v260 = vpack.c.b16 %v257, %v257
      %v261 = vpack.c.b16 %v258, %v258
      %v336 = vunpack.c.l.b16 %v174
      %v337 = vunpack.c.h.b16 %v174
      %v338 = vunpack.c.l.b16 %v175
      %v339 = vunpack.c.l.b16 %v176
      %v340 = vunpack.c.h.b16 %v176
      %v341 = vunpack.c.l.b16 %v177
      %v342 = vunpack.c.l.b16 %v178
      %v343 = vunpack.c.h.b16 %v178
      %v344 = vunpack.c.l.b16 %v179
      %v345 = vunpack.c.l.b16 %v180
      %v346 = vunpack.c.h.b16 %v180
      %v347 = vunpack.c.l.b16 %v181
      %v348 = vunpack.c.l.b16 %v182
      %v349 = vunpack.c.h.b16 %v182
      %v350 = vunpack.c.l.b16 %v183
      %v351 = vunpack.c.l.b16 %v184
      %v352 = vunpack.c.h.b16 %v184
      %v353 = vunpack.c.l.b16 %v185
      %v354 = vunpack.c.l.b16 %v186
      %v355 = vunpack.c.h.b16 %v186
      %v356 = vunpack.c.l.b16 %v187
      %v357 = vunpack.c.l.b16 %v188
      %v358 = vunpack.c.h.b16 %v188
      %v359 = vunpack.c.l.b16 %v189
      %v360 = vunpack.c.l.b16 %v190
      %v361 = vunpack.c.h.b16 %v190
      %v362 = vunpack.c.l.b16 %v191
      %v363 = vunpack.c.l.b16 %v192
      %v364 = vunpack.c.h.b16 %v192
      %v365 = vunpack.c.l.b16 %v193
      %v366 = vunpack.c.l.b16 %v194
      %v367 = vunpack.c.h.b16 %v194
      %v368 = vunpack.c.l.b16 %v195
      %v369 = vunpack.c.l.b16 %v196
      %v370 = vunpack.c.h.b16 %v196
      %v371 = vunpack.c.l.b16 %v197
      %v372 = vunpack.c.l.b16 %v198
      %v373 = vunpack.c.h.b16 %v198
      %v374 = vunpack.c.l.b16 %v199
      %v375 = vunpack.c.l.b16 %v200
      %v376 = vunpack.c.h.b16 %v200
      %v377 = vunpack.c.l.b16 %v201
      %v378 = vunpack.c.l.b16 %v202
      %v379 = vunpack.c.h.b16 %v202
      %v380 = vunpack.c.l.b16 %v203
      %v381 = vunpack.c.l.b16 %v204
      %v382 = vunpack.c.h.b16 %v204
      %v383 = vunpack.c.l.b16 %v205
      %v384 = vunpack.c.l.b16 %v206
      %v385 = vunpack.c.h.b16 %v206
      %v386 = vunpack.c.l.b16 %v207
      %v387 = vunpack.c.l.b16 %v208
      %v388 = vunpack.c.h.b16 %v208
      %v389 = vunpack.c.l.b16 %v209
      %v390 = vunpack.c.l.b16 %v210
      %v391 = vunpack.c.h.b16 %v210
      %v392 = vunpack.c.l.b16 %v211
      %v393 = vunpack.c.l.b16 %v212
      %v394 = vunpack.c.h.b16 %v212
      %v395 = vunpack.c.l.b16 %v213
      %v396 = vunpack.c.l.b16 %v214
      %v397 = vunpack.c.h.b16 %v214
      %v398 = vunpack.c.l.b16 %v215
      %v399 = vunpack.c.l.b16 %v216
      %v400 = vunpack.c.h.b16 %v216
      %v401 = vunpack.c.l.b16 %v217
      %v402 = vunpack.c.l.b16 %v218
      %v403 = vunpack.c.h.b16 %v218
      %v404 = vunpack.c.l.b16 %v219
      %v405 = vunpack.c.l.b16 %v220
      %v406 = vunpack.c.h.b16 %v220
      %v407 = vunpack.c.l.b16 %v221
      %v408 = vunpack.c.l.b16 %v222
      %v409 = vunpack.c.h.b16 %v222
      %v410 = vunpack.c.l.b16 %v223
      %v411 = vunpack.c.l.b16 %v224
      %v412 = vunpack.c.h.b16 %v224
      %v413 = vunpack.c.l.b16 %v225
      %v414 = vunpack.c.l.b16 %v226
      %v415 = vunpack.c.h.b16 %v226
      %v416 = vunpack.c.l.b16 %v227
      %v417 = vunpack.c.l.b16 %v228
      %v418 = vunpack.c.h.b16 %v228
      %v419 = vunpack.c.l.b16 %v229
      %v420 = vunpack.c.l.b16 %v230
      %v421 = vunpack.c.h.b16 %v230
      %v422 = vunpack.c.l.b16 %v231
      %v423 = vunpack.c.l.b16 %v232
      %v424 = vunpack.c.h.b16 %v232
      %v425 = vunpack.c.l.b16 %v233
      %v426 = vunpack.c.l.b16 %v234
      %v427 = vunpack.c.h.b16 %v234
      %v428 = vunpack.c.l.b16 %v235
      %v429 = vunpack.c.l.b16 %v236
      %v430 = vunpack.c.h.b16 %v236
      %v431 = vunpack.c.l.b16 %v237
      %v432 = vunpack.c.l.b16 %v238
      %v433 = vunpack.c.h.b16 %v238
      %v434 = vunpack.c.l.b16 %v239
      %v435 = vunpack.c.l.b16 %v240
      %v436 = vunpack.c.h.b16 %v240
      %v437 = vunpack.c.l.b16 %v241
      %v438 = vunpack.c.l.b16 %v242
      %v439 = vunpack.c.h.b16 %v242
      %v440 = vunpack.c.l.b16 %v243
      %v441 = vunpack.c.l.b16 %v244
      %v442 = vunpack.c.h.b16 %v244
      %v443 = vunpack.c.l.b16 %v245
      %v444 = vpack.c.b16 %v339, %v336
      %v445 = vpack.c.b16 %v340, %v337
      %v446 = vpack.c.b16 %v341, %v338
      %v447 = vpack.c.b16 %v345, %v342
      %v448 = vpack.c.b16 %v346, %v343
      %v449 = vpack.c.b16 %v347, %v344
      %v450 = vpack.c.b16 %v351, %v348
      %v451 = vpack.c.b16 %v352, %v349
      %v452 = vpack.c.b16 %v353, %v350
      %v453 = vpack.c.b16 %v357, %v354
      %v454 = vpack.c.b16 %v358, %v355
      %v455 = vpack.c.b16 %v359, %v356
      %v456 = vpack.c.b16 %v363, %v360
      %v457 = vpack.c.b16 %v364, %v361
      %v458 = vpack.c.b16 %v365, %v362
      %v459 = vpack.c.b16 %v369, %v366
      %v460 = vpack.c.b16 %v370, %v367
      %v461 = vpack.c.b16 %v371, %v368
      %v462 = vpack.c.b16 %v375, %v372
      %v463 = vpack.c.b16 %v376, %v373
      %v464 = vpack.c.b16 %v377, %v374
      %v465 = vpack.c.b16 %v381, %v378
      %v466 = vpack.c.b16 %v382, %v379
      %v467 = vpack.c.b16 %v383, %v380
      %v468 = vpack.c.b16 %v387, %v384
      %v469 = vpack.c.b16 %v388, %v385
      %v470 = vpack.c.b16 %v389, %v386
      %v471 = vpack.c.b16 %v393, %v390
      %v472 = vpack.c.b16 %v394, %v391
      %v473 = vpack.c.b16 %v395, %v392
      %v474 = vpack.c.b16 %v399, %v396
      %v475 = vpack.c.b16 %v400, %v397
      %v476 = vpack.c.b16 %v401, %v398
      %v477 = vpack.c.b16 %v405, %v402
      %v478 = vpack.c.b16 %v406, %v403
      %v479 = vpack.c.b16 %v407, %v404
      %v480 = vpack.c.b16 %v411, %v408
      %v481 = vpack.c.b16 %v412, %v409
      %v482 = vpack.c.b16 %v413, %v410
      %v483 = vpack.c.b16 %v417, %v414
      %v484 = vpack.c.b16 %v418, %v415
      %v485 = vpack.c.b16 %v419, %v416
      %v486 = vpack.c.b16 %v423, %v420
      %v487 = vpack.c.b16 %v424, %v421
      %v488 = vpack.c.b16 %v425, %v422
      %v489 = vpack.c.b16 %v429, %v426
      %v490 = vpack.c.b16 %v430, %v427
      %v491 = vpack.c.b16 %v431, %v428
      %v492 = vpack.c.b16 %v435, %v432
      %v493 = vpack.c.b16 %v436, %v433
      %v494 = vpack.c.b16 %v437, %v434
      %v495 = vpack.c.b16 %v441, %v438
      %v496 = vpack.c.b16 %v442, %v439
      %v497 = vpack.c.b16 %v443, %v440
      %vm552 = vcmask 261120
      %v554 = vsel %vm552, %v261, 0
      %556 = vmatpush.bf16.msra.mxu0 %v465
      %557 = vmatpush.bf16.msra.mxu0 %v462
      %558 = vmatpush.bf16.msra.mxu0 %v459
      %559 = vmatpush.bf16.msra.mxu0 %v456
      %560 = vmatpush.bf16.msra.mxu0 %v453
      %561 = vmatpush.bf16.msra.mxu0 %v450
      %562 = vmatpush.bf16.msra.mxu0 %v447
      %563 = vmatpush.bf16.msra.mxu0 %v444
      %564 = vmatmul.bf16.gmra.mxu0 %v259
      %v565 = vpop.f32.mrf.mxu0
      %v566 = vadd.f32 %v248, %v565
      %v567 = vpop.f32.mrf.mxu0
      %568 = vdwg.mxu0
      %569 = vmatpush.bf16.msra.mxu0 %v489
      %570 = vmatpush.bf16.msra.mxu0 %v486
      %571 = vmatpush.bf16.msra.mxu0 %v483
      %572 = vmatpush.bf16.msra.mxu0 %v480
      %573 = vmatpush.bf16.msra.mxu0 %v477
      %574 = vmatpush.bf16.msra.mxu0 %v474
      %575 = vmatpush.bf16.msra.mxu0 %v471
      %576 = vmatpush.bf16.msra.mxu0 %v468
      %577 = vmatmul.bf16.gmra.mxu0 %v260
      %v578 = vpop.f32.mrf.mxu0
      %v579 = vadd.f32 %v566, %v578
      %v580 = vpop.f32.mrf.mxu0
      %581 = vdwg.mxu0
      %582 = vmatpush.bf16.msra.mxu0 0
      %583 = vmatpush.bf16.msra.mxu0 0
      %584 = vmatpush.bf16.msra.mxu0 0
      %585 = vmatpush.bf16.msra.mxu0 0
      %586 = vmatpush.bf16.msra.mxu0 0
      %587 = vmatpush.bf16.msra.mxu0 0
      %588 = vmatpush.bf16.msra.mxu0 %v495
      %589 = vmatpush.bf16.msra.mxu0 %v492
      %590 = vmatmul.bf16.gmra.mxu0 %v554
      %v591 = vpop.f32.mrf.mxu0
      %v592 = vadd.f32 %v579, %v591
      %v593 = vpop.f32.mrf.mxu0
      %594 = vdwg.mxu0
      %595 = vmatpush.bf16.msra.mxu0 %v466
      %596 = vmatpush.bf16.msra.mxu0 %v463
      %597 = vmatpush.bf16.msra.mxu0 %v460
      %598 = vmatpush.bf16.msra.mxu0 %v457
      %599 = vmatpush.bf16.msra.mxu0 %v454
      %600 = vmatpush.bf16.msra.mxu0 %v451
      %601 = vmatpush.bf16.msra.mxu0 %v448
      %602 = vmatpush.bf16.msra.mxu0 %v445
      %603 = vmatmul.bf16.gmra.mxu0 %v259
      %v604 = vpop.f32.mrf.mxu0
      %v605 = vadd.f32 %v249, %v604
      %v606 = vpop.f32.mrf.mxu0
      %607 = vdwg.mxu0
      %608 = vmatpush.bf16.msra.mxu0 %v490
      %609 = vmatpush.bf16.msra.mxu0 %v487
      %610 = vmatpush.bf16.msra.mxu0 %v484
      %611 = vmatpush.bf16.msra.mxu0 %v481
      %612 = vmatpush.bf16.msra.mxu0 %v478
      %613 = vmatpush.bf16.msra.mxu0 %v475
      %614 = vmatpush.bf16.msra.mxu0 %v472
      %615 = vmatpush.bf16.msra.mxu0 %v469
      %616 = vmatmul.bf16.gmra.mxu0 %v260
      %v617 = vpop.f32.mrf.mxu0
      %v618 = vadd.f32 %v605, %v617
      %v619 = vpop.f32.mrf.mxu0
      %620 = vdwg.mxu0
      %621 = vmatpush.bf16.msra.mxu0 0
      %622 = vmatpush.bf16.msra.mxu0 0
      %623 = vmatpush.bf16.msra.mxu0 0
      %624 = vmatpush.bf16.msra.mxu0 0
      %625 = vmatpush.bf16.msra.mxu0 0
      %626 = vmatpush.bf16.msra.mxu0 0
      %627 = vmatpush.bf16.msra.mxu0 %v496
      %628 = vmatpush.bf16.msra.mxu0 %v493
      %629 = vmatmul.bf16.gmra.mxu0 %v554
      %v630 = vpop.f32.mrf.mxu0
      %v631 = vadd.f32 %v618, %v630
      %v632 = vpop.f32.mrf.mxu0
      %633 = vdwg.mxu0
      %634 = vmatpush.bf16.msra.mxu0 %v467
      %635 = vmatpush.bf16.msra.mxu0 %v464
      %636 = vmatpush.bf16.msra.mxu0 %v461
      %637 = vmatpush.bf16.msra.mxu0 %v458
      %638 = vmatpush.bf16.msra.mxu0 %v455
      %639 = vmatpush.bf16.msra.mxu0 %v452
      %640 = vmatpush.bf16.msra.mxu0 %v449
      %641 = vmatpush.bf16.msra.mxu0 %v446
      %642 = vmatmul.bf16.gmra.mxu0 %v259
      %v643 = vpop.f32.mrf.mxu0
      %v644 = vadd.f32 %v250, %v643
      %v645 = vpop.f32.mrf.mxu0
      %646 = vdwg.mxu0
      %647 = vmatpush.bf16.msra.mxu0 %v491
      %648 = vmatpush.bf16.msra.mxu0 %v488
      %649 = vmatpush.bf16.msra.mxu0 %v485
      %650 = vmatpush.bf16.msra.mxu0 %v482
      %651 = vmatpush.bf16.msra.mxu0 %v479
      %652 = vmatpush.bf16.msra.mxu0 %v476
      %653 = vmatpush.bf16.msra.mxu0 %v473
      %654 = vmatpush.bf16.msra.mxu0 %v470
      %655 = vmatmul.bf16.gmra.mxu0 %v260
      %v656 = vpop.f32.mrf.mxu0
      %v657 = vadd.f32 %v644, %v656
      %v658 = vpop.f32.mrf.mxu0
      %659 = vdwg.mxu0
      %660 = vmatpush.bf16.msra.mxu0 0
      %661 = vmatpush.bf16.msra.mxu0 0
      %662 = vmatpush.bf16.msra.mxu0 0
      %663 = vmatpush.bf16.msra.mxu0 0
      %664 = vmatpush.bf16.msra.mxu0 0
      %665 = vmatpush.bf16.msra.mxu0 0
      %666 = vmatpush.bf16.msra.mxu0 %v497
      %667 = vmatpush.bf16.msra.mxu0 %v494
      %668 = vmatmul.bf16.gmra.mxu0 %v554
      %v669 = vpop.f32.mrf.mxu0
      %v670 = vadd.f32 %v657, %v669
      %v671 = vpop.f32.mrf.mxu0
      %672 = vdwg.mxu0
      %v673 = vmax.f32 %v592, 0.0
      %v674 = vmax.f32 %v631, 0.0
      %v675 = vmax.f32 %v670, 0.0
      %v676 = vpack.c.bf16 %v674, %v673
      %v677 = vpack.c.bf16 %v675, %v675
      %678 = vst [vmem:[%s170] sm:$0xff] %v676
      %679 = vst [vmem:[%s170 + $0x8] sm:$0xf] %v677
      %p680 = scmp.lt.s32.totalorder %s14, 1
      %s681 = scalar_select %p680, %s14, 1
      %s682 = smul.addr %s681, 3
      %s683 = smul.addr %s682, 4
      %s684 = scalar_lea.vmem %s3, %s683
      // Predicated region
      $region33: #{conv_stream_pallas.3} parent=31 // pred_check
        %p685 = pneg %p100
      $region34: #{conv_stream_pallas.3} parent=31 // pred_check_branch
        %687 = sbr.rel (%p685) target = $region36
      $region35: #{conv_stream_pallas.3} parent=31 // pred_region
        _
      $region36: #{conv_stream_pallas.3} parent=31 // pred_fallthru
        _
    $region32: #{conv_stream_pallas.3} parent=5 // pred_fallthru
      _
    %p688 = scmp.le.s32.totalorder 2, %s9
    // Predicated region
    $region37: #{conv_stream_pallas.3} parent=5 // pred_check
      %p689 = pneg %p688
    $region38: #{conv_stream_pallas.3} parent=5 // pred_check_branch
      %691 = sbr.rel (%p689) target = $region40
    $region39: #{conv_stream_pallas.3} parent=5 // pred_region
      %s692 = ssub.s32 %s9, 2
      // Predicated region
      $region41: #{conv_stream_pallas.3} parent=39 // pred_check
        %p693 = pneg %p106
      $region42: #{conv_stream_pallas.3} parent=39 // pred_check_branch
        %695 = sbr.rel (%p693) target = $region44
      $region43: #{conv_stream_pallas.3} parent=39 // pred_region
        %p696 = scmp.lt.s32.totalorder %s15, 1
        %s697 = scalar_select %p696, %s15, 1
        %s698 = smul.addr %s697, 3
        %s699 = smul.addr %s698, 4
        %s700 = scalar_lea.vmem %s3, %s699
      $region44: #{conv_stream_pallas.3} parent=39 // pred_fallthru
        _
    $region40: #{conv_stream_pallas.3} parent=5 // pred_fallthru
      _
  $region6: #{conv_stream_pallas.3} parent=0 // loop_footer
    %s13 = sadd.s32 1, %s9
  $region7: #{conv_stream_pallas.3} parent=0 // loop_footer_branch
    %8 = sbr.rel target = $region3
  $region8: #{conv_stream_pallas.3} parent=0 // loop_exit
    _

// kernel: conv_stream_pallas.4
$region0: #{conv_stream_pallas.4}
  #allocation0 [shape = 'u32[]', space=smem, size = 0x4, offset = 0x4, fixed_abs, tag = 'smem constant byte address 0x4 - core index']
  #allocation1 [shape = 'u32[72,128]{1,0:T(1,128)}', space=vmem, size = 0x9000, scoped, tag = 'internal scratch']
  %s0 = inlined_call_operand.vmem [shape: bf16[32,432], index: 0, kind: input, shape index: {}]
  %s1 = inlined_call_operand.vmem [shape: bf16[432,96], index: 1, kind: input, shape index: {}]
  %s2 = inlined_call_operand.vmem [shape: f32[1,96], index: 2, kind: input, shape index: {}]
  %s3 = inlined_call_operand.vmem [shape: bf16[32,96], index: 3, kind: output, shape index: {}]
  %s4 = sld [smem:[#allocation0]]
  $region45: #{conv_stream_pallas.4} parent=0
    _
  %s6 = ssub.s32 1, %s4
  %s7 = scalar_select 0, %s6, %s4
  loop: start=0, step=1, limit=4
  $region2: #{conv_stream_pallas.4} parent=0 // loop_pre_header
    _
  $region3: #{conv_stream_pallas.4} parent=0 // loop_header
    %s9 = sphi 0, %s13
    %p10 = scmp.ge.s32.totalorder %s9, 4
    %s19 = sphi 0, %s21
    %s22 = sphi 0, %s19
    %s23 = sphi 0, %s22
    %s39 = sphi 0, %s23
    %s43 = sphi 0, %s43
    %s45 = sphi 0, %s43
    %s46 = sphi 0, %s45
    %s60 = sphi 0, %s46
    %s64 = sphi 0, %s64
    %s66 = sphi 0, %s64
    %s67 = sphi 0, %s66
    %s81 = sphi 0, %s67
    %s87 = sphi 0, %s89
    %s90 = sphi 0, %s87
    %s91 = sphi 0, %s90
    %s107 = sphi 0, %s91
  $region4: #{conv_stream_pallas.4} parent=0 // loop_header_branch
    %12 = sbr.rel (%p10) target = $region8
  $region5: #{conv_stream_pallas.4} parent=0 // loop_body
    %s14 = ssub.s32 %s9, 1
    %s15 = ssub.s32 %s9, 2
    %s16 = sadd.s32 %s9, 1
    %s17 = ssub.s32 %s9, %s16
    %p18 = scmp.eq.s32.totalorder %s17, 0
    %s20 = sadd.s32 %s19, 1
    %s21 = scalar_select %p18, %s19, %s20
    %p24 = pneg %p18
    %p25 = scmp.eq.s32.totalorder %s9, 1
    %p26 = por %p24, %p25
    %p27 = scmp.ne.s32.totalorder %s19, %s22
    %p28 = scmp.eq.s32.totalorder %s9, 0
    %p29 = por %p27, %p28
    %p30 = scmp.ne.s32.totalorder %s19, %s22
    %p31 = scmp.eq.s32.totalorder %s14, 1
    %p32 = por %p30, %p31
    %p33 = scmp.ne.s32.totalorder %s22, %s23
    %p34 = scmp.eq.s32.totalorder %s14, 0
    %p35 = por %p33, %p34
    %p36 = scmp.ne.s32.totalorder %s22, %s23
    %p37 = scmp.eq.s32.totalorder %s15, 1
    %p38 = por %p36, %p37
    %p40 = scmp.ne.s32.totalorder %s23, %s39
    %p41 = scmp.eq.s32.totalorder %s15, 0
    %p42 = por %p40, %p41
    %s44 = sadd.s32 %s43, 1
    %p47 = scmp.eq.s32.totalorder %s9, 1
    %p48 = scmp.ne.s32.totalorder %s43, %s45
    %p49 = scmp.eq.s32.totalorder %s9, 0
    %p50 = por %p48, %p49
    %p51 = scmp.ne.s32.totalorder %s43, %s45
    %p52 = scmp.eq.s32.totalorder %s14, 1
    %p53 = por %p51, %p52
    %p54 = scmp.ne.s32.totalorder %s45, %s46
    %p55 = scmp.eq.s32.totalorder %s14, 0
    %p56 = por %p54, %p55
    %p57 = scmp.ne.s32.totalorder %s45, %s46
    %p58 = scmp.eq.s32.totalorder %s15, 1
    %p59 = por %p57, %p58
    %p61 = scmp.ne.s32.totalorder %s46, %s60
    %p62 = scmp.eq.s32.totalorder %s15, 0
    %p63 = por %p61, %p62
    %s65 = sadd.s32 %s64, 1
    %p68 = scmp.eq.s32.totalorder %s9, 1
    %p69 = scmp.ne.s32.totalorder %s64, %s66
    %p70 = scmp.eq.s32.totalorder %s9, 0
    %p71 = por %p69, %p70
    %p72 = scmp.ne.s32.totalorder %s64, %s66
    %p73 = scmp.eq.s32.totalorder %s14, 1
    %p74 = por %p72, %p73
    %p75 = scmp.ne.s32.totalorder %s66, %s67
    %p76 = scmp.eq.s32.totalorder %s14, 0
    %p77 = por %p75, %p76
    %p78 = scmp.ne.s32.totalorder %s66, %s67
    %p79 = scmp.eq.s32.totalorder %s15, 1
    %p80 = por %p78, %p79
    %p82 = scmp.ne.s32.totalorder %s67, %s81
    %p83 = scmp.eq.s32.totalorder %s15, 0
    %p84 = por %p82, %p83
    %s85 = ssub.s32 %s9, %s16
    %p86 = scmp.eq.s32.totalorder %s85, 0
    %s88 = sadd.s32 %s87, 1
    %s89 = scalar_select %p86, %s87, %s88
    %p92 = pneg %p86
    %p93 = scmp.eq.s32.totalorder %s9, 1
    %p94 = por %p92, %p93
    %p95 = scmp.ne.s32.totalorder %s87, %s90
    %p96 = scmp.eq.s32.totalorder %s9, 0
    %p97 = por %p95, %p96
    %p98 = scmp.ne.s32.totalorder %s87, %s90
    %p99 = scmp.eq.s32.totalorder %s14, 1
    %p100 = por %p98, %p99
    %p101 = scmp.ne.s32.totalorder %s90, %s91
    %p102 = scmp.eq.s32.totalorder %s14, 0
    %p103 = por %p101, %p102
    %p104 = scmp.ne.s32.totalorder %s90, %s91
    %p105 = scmp.eq.s32.totalorder %s15, 1
    %p106 = por %p104, %p105
    %p108 = scmp.ne.s32.totalorder %s91, %s107
    %p109 = scmp.eq.s32.totalorder %s15, 0
    %p110 = por %p108, %p109
    %p111 = scmp.le.s32.totalorder 1, %s9
    %p112 = scmp.lt.s32.totalorder %s9, 3
    %p113 = pnand %p111, %p112
    %p114 = pneg %p113
    // Predicated region
    $region9: #{conv_stream_pallas.4} parent=5 // pred_check
      _
    $region10: #{conv_stream_pallas.4} parent=5 // pred_check_branch
      %116 = sbr.rel (%p113) target = $region12
    $region11: #{conv_stream_pallas.4} parent=5 // pred_region
      %s117 = ssub.s32 %s9, 1
      // Predicated region
      $region13: #{conv_stream_pallas.4} parent=11 // pred_check
        %p118 = pneg %p56
      $region14: #{conv_stream_pallas.4} parent=11 // pred_check_branch
        %120 = sbr.rel (%p118) target = $region16
      $region15: #{conv_stream_pallas.4} parent=11 // pred_region
        _
      $region16: #{conv_stream_pallas.4} parent=11 // pred_fallthru
        _
      // Predicated region
      $region17: #{conv_stream_pallas.4} parent=11 // pred_check
        %p121 = pneg %p77
      $region18: #{conv_stream_pallas.4} parent=11 // pred_check_branch
        %123 = sbr.rel (%p121) target = $region20
      $region19: #{conv_stream_pallas.4} parent=11 // pred_region
        _
      $region20: #{conv_stream_pallas.4} parent=11 // pred_fallthru
        _
    $region12: #{conv_stream_pallas.4} parent=5 // pred_fallthru
      _
    %p124 = scmp.lt.s32.totalorder %s9, 2
    // Predicated region
    $region21: #{conv_stream_pallas.4} parent=5 // pred_check
      %p125 = pneg %p124
    $region22: #{conv_stream_pallas.4} parent=5 // pred_check_branch
      %127 = sbr.rel (%p125) target = $region24
    $region23: #{conv_stream_pallas.4} parent=5 // pred_region
      // Predicated region
      $region25: #{conv_stream_pallas.4} parent=23 // pred_check
        %p128 = pneg %p29
      $region26: #{conv_stream_pallas.4} parent=23 // pred_check_branch
        %130 = sbr.rel (%p128) target = $region28
      $region27: #{conv_stream_pallas.4} parent=23 // pred_region
        %s131 = smul.u32 2, %s9
        %p132 = scmp.lt.s32.totalorder %s131, 3
        %s133 = scalar_select %p132, %s131, 3
        %s134 = smul.addr %s133, 4
        %s135 = smul.addr %s134, 4
        %s136 = scalar_lea.vmem %s0, %s135
        %s137 = smul.u32 2, %s9
      $region28: #{conv_stream_pallas.4} parent=23 // pred_fallthru
        _
    $region24: #{conv_stream_pallas.4} parent=5 // pred_fallthru
      _
    %p138 = scmp.le.s32.totalorder 1, %s9
    %p139 = scmp.lt.s32.totalorder %s9, 3
    %p140 = pnand %p138, %p139
    %p141 = pneg %p140
    // Predicated region
    $region29: #{conv_stream_pallas.4} parent=5 // pred_check
      _
    $region30: #{conv_stream_pallas.4} parent=5 // pred_check_branch
      %143 = sbr.rel (%p140) target = $region32
    $region31: #{conv_stream_pallas.4} parent=5 // pred_region
      %s144 = ssub.s32 %s9, 1
      %s145 = smul.u32 2, %s14
      %p146 = scmp.lt.s32.totalorder %s145, 3
      %s147 = scalar_select %p146, %s145, 3
      %s148 = smul.addr %s147, 4
      %s149 = smul.addr %s148, 4
      %s150 = scalar_lea.vmem %s0, %s149
      %p151 = pneg %p35
      %p152 = pneg %p32
      %p153 = pneg %p56
      %p154 = pneg %p53
      %p155 = pneg %p77
      %p156 = pneg %p74
      %p157 = pneg %p103
      %p158 = pneg %p100
      %s159 = smul.u32 2, %s14
      %p160 = scmp.lt.s32.totalorder %s159, 3
      %s161 = scalar_select %p160, %s159, 3
      %s162 = smul.addr %s161, 4
      %s163 = scalar_lea.vmem %s3, %s162
      %s164 = smul.u32 2, %s14
      %p165 = scmp.lt.s32.totalorder %s164, 3
      %s166 = scalar_select %p165, %s164, 3
      %s167 = smul.addr %s166, 4
      %s168 = smul.addr %s167, 4
      %s169 = scalar_lea.vmem %s0, %s168
      %s170 = smul.u32 2, %s14
      %s171 = smul.u32 2, %s14
      %p172 = scmp.lt.s32.totalorder %s171, 3
      %s173 = scalar_select %p172, %s171, 3
      %s174 = smul.addr %s173, 4
      %s175 = scalar_lea.vmem %s3, %s174
      %s176 = smul.u32 2, %s14
      %v178 = vld [vmem:[%s169] sm:$0xff]
      %v179 = vld [vmem:[%s169 + $0x8] sm:$0xff]
      %v180 = vld [vmem:[%s169 + $0x10] sm:$0xff]
      %v181 = vld [vmem:[%s169 + $0x18] sm:$0xff]
      %v182 = vld [vmem:[%s1] sm:$0xf]
      %v183 = vld [vmem:[%s1 + $0x4] sm:$0xf]
      %v184 = vld [vmem:[%s1 + $0x8] sm:$0xf]
      %v185 = vld [vmem:[%s1 + $0xc] sm:$0xf]
      %v186 = vld [vmem:[%s1 + $0x10] sm:$0xf]
      %v187 = vld [vmem:[%s1 + $0x14] sm:$0xf]
      %v188 = vld [vmem:[%s1 + $0x18] sm:$0xf]
      %v189 = vld [vmem:[%s1 + $0x1c] sm:$0xf]
      %v190 = vld [vmem:[%s1 + $0x20] sm:$0xf]
      %v191 = vld [vmem:[%s1 + $0x24] sm:$0xf]
      %v192 = vld [vmem:[%s1 + $0x28] sm:$0xf]
      %v193 = vld [vmem:[%s1 + $0x2c] sm:$0xf]
      %v194 = vld [vmem:[%s1 + $0x30] sm:$0xf]
      %v195 = vld [vmem:[%s1 + $0x34] sm:$0xf]
      %v196 = vld [vmem:[%s1 + $0x38] sm:$0xf]
      %v197 = vld [vmem:[%s1 + $0x3c] sm:$0xf]
      %v198 = vld [vmem:[%s1 + $0x40] sm:$0xf]
      %v199 = vld [vmem:[%s1 + $0x44] sm:$0xf]
      %v200 = vld [vmem:[%s1 + $0x48] sm:$0xf]
      %v201 = vld [vmem:[%s1 + $0x4c] sm:$0xf]
      %v202 = vld [vmem:[%s1 + $0x50] sm:$0xf]
      %v203 = vld [vmem:[%s1 + $0x54] sm:$0xf]
      %v204 = vld [vmem:[%s1 + $0x58] sm:$0xf]
      %v205 = vld [vmem:[%s1 + $0x5c] sm:$0xf]
      %v206 = vld [vmem:[%s1 + $0x60] sm:$0xf]
      %v207 = vld [vmem:[%s1 + $0x64] sm:$0xf]
      %v208 = vld [vmem:[%s1 + $0x68] sm:$0xf]
      %v209 = vld [vmem:[%s1 + $0x6c] sm:$0xf]
      %v210 = vld [vmem:[%s1 + $0x70] sm:$0xf]
      %v211 = vld [vmem:[%s1 + $0x74] sm:$0xf]
      %v212 = vld [vmem:[%s1 + $0x78] sm:$0xf]
      %v213 = vld [vmem:[%s1 + $0x7c] sm:$0xf]
      %v214 = vld [vmem:[%s1 + $0x80] sm:$0xf]
      %v215 = vld [vmem:[%s1 + $0x84] sm:$0xf]
      %v216 = vld [vmem:[%s1 + $0x88] sm:$0xf]
      %v217 = vld [vmem:[%s1 + $0x8c] sm:$0xf]
      %v218 = vld [vmem:[%s1 + $0x90] sm:$0xf]
      %v219 = vld [vmem:[%s1 + $0x94] sm:$0xf]
      %v220 = vld [vmem:[%s1 + $0x98] sm:$0xf]
      %v221 = vld [vmem:[%s1 + $0x9c] sm:$0xf]
      %v222 = vld [vmem:[%s1 + $0xa0] sm:$0xf]
      %v223 = vld [vmem:[%s1 + $0xa4] sm:$0xf]
      %v224 = vld [vmem:[%s1 + $0xa8] sm:$0xf]
      %v225 = vld [vmem:[%s1 + $0xac] sm:$0xf]
      %v226 = vld [vmem:[%s1 + $0xb0] sm:$0xf]
      %v227 = vld [vmem:[%s1 + $0xb4] sm:$0xf]
      %v228 = vld [vmem:[%s1 + $0xb8] sm:$0xf]
      %v229 = vld [vmem:[%s1 + $0xbc] sm:$0xf]
      %v230 = vld [vmem:[%s1 + $0xc0] sm:$0xf]
      %v231 = vld [vmem:[%s1 + $0xc4] sm:$0xf]
      %v232 = vld [vmem:[%s1 + $0xc8] sm:$0xf]
      %v233 = vld [vmem:[%s1 + $0xcc] sm:$0xf]
      %v234 = vld [vmem:[%s1 + $0xd0] sm:$0xf]
      %v235 = vld [vmem:[%s1 + $0xd4] sm:$0xf]
      %v236 = vld [vmem:[%s2] sm:$0x1]
      %v238 = vperm.slane %v236, 0
      %v244 = vunpack.c.l.b16 %v178
      %v245 = vunpack.c.h.b16 %v178
      %v246 = vunpack.c.l.b16 %v179
      %v247 = vunpack.c.h.b16 %v179
      %v248 = vunpack.c.l.b16 %v180
      %v249 = vunpack.c.h.b16 %v180
      %v250 = vunpack.c.l.b16 %v181
      %v251 = vunpack.c.h.b16 %v181
      %v252 = vpack.c.b16 %v248, %v244
      %v253 = vpack.c.b16 %v249, %v245
      %v254 = vpack.c.b16 %v250, %v246
      %v255 = vpack.c.b16 %v251, %v247
      %v313 = vunpack.c.l.b16 %v182
      %v314 = vunpack.c.l.b16 %v183
      %v315 = vunpack.c.l.b16 %v184
      %v316 = vunpack.c.l.b16 %v185
      %v317 = vunpack.c.l.b16 %v186
      %v318 = vunpack.c.l.b16 %v187
      %v319 = vunpack.c.l.b16 %v188
      %v320 = vunpack.c.l.b16 %v189
      %v321 = vunpack.c.l.b16 %v190
      %v322 = vunpack.c.l.b16 %v191
      %v323 = vunpack.c.l.b16 %v192
      %v324 = vunpack.c.l.b16 %v193
      %v325 = vunpack.c.l.b16 %v194
      %v326 = vunpack.c.l.b16 %v195
      %v327 = vunpack.c.l.b16 %v196
      %v328 = vunpack.c.l.b16 %v197
      %v329 = vunpack.c.l.b16 %v198
      %v330 = vunpack.c.l.b16 %v199
      %v331 = vunpack.c.l.b16 %v200
      %v332 = vunpack.c.l.b16 %v201
      %v333 = vunpack.c.l.b16 %v202
      %v334 = vunpack.c.l.b16 %v203
      %v335 = vunpack.c.l.b16 %v204
      %v336 = vunpack.c.l.b16 %v205
      %v337 = vunpack.c.l.b16 %v206
      %v338 = vunpack.c.l.b16 %v207
      %v339 = vunpack.c.l.b16 %v208
      %v340 = vunpack.c.l.b16 %v209
      %v341 = vunpack.c.l.b16 %v210
      %v342 = vunpack.c.l.b16 %v211
      %v343 = vunpack.c.l.b16 %v212
      %v344 = vunpack.c.l.b16 %v213
      %v345 = vunpack.c.l.b16 %v214
      %v346 = vunpack.c.l.b16 %v215
      %v347 = vunpack.c.l.b16 %v216
      %v348 = vunpack.c.l.b16 %v217
      %v349 = vunpack.c.l.b16 %v218
      %v350 = vunpack.c.l.b16 %v219
      %v351 = vunpack.c.l.b16 %v220
      %v352 = vunpack.c.l.b16 %v221
      %v353 = vunpack.c.l.b16 %v222
      %v354 = vunpack.c.l.b16 %v223
      %v355 = vunpack.c.l.b16 %v224
      %v356 = vunpack.c.l.b16 %v225
      %v357 = vunpack.c.l.b16 %v226
      %v358 = vunpack.c.l.b16 %v227
      %v359 = vunpack.c.l.b16 %v228
      %v360 = vunpack.c.l.b16 %v229
      %v361 = vunpack.c.l.b16 %v230
      %v362 = vunpack.c.l.b16 %v231
      %v363 = vunpack.c.l.b16 %v232
      %v364 = vunpack.c.l.b16 %v233
      %v365 = vunpack.c.l.b16 %v234
      %v366 = vunpack.c.l.b16 %v235
      %v367 = vpack.c.b16 %v314, %v313
      %v368 = vpack.c.b16 %v316, %v315
      %v369 = vpack.c.b16 %v318, %v317
      %v370 = vpack.c.b16 %v320, %v319
      %v371 = vpack.c.b16 %v322, %v321
      %v372 = vpack.c.b16 %v324, %v323
      %v373 = vpack.c.b16 %v326, %v325
      %v374 = vpack.c.b16 %v328, %v327
      %v375 = vpack.c.b16 %v330, %v329
      %v376 = vpack.c.b16 %v332, %v331
      %v377 = vpack.c.b16 %v334, %v333
      %v378 = vpack.c.b16 %v336, %v335
      %v379 = vpack.c.b16 %v338, %v337
      %v380 = vpack.c.b16 %v340, %v339
      %v381 = vpack.c.b16 %v342, %v341
      %v382 = vpack.c.b16 %v344, %v343
      %v383 = vpack.c.b16 %v346, %v345
      %v384 = vpack.c.b16 %v348, %v347
      %v385 = vpack.c.b16 %v350, %v349
      %v386 = vpack.c.b16 %v352, %v351
      %v387 = vpack.c.b16 %v354, %v353
      %v388 = vpack.c.b16 %v356, %v355
      %v389 = vpack.c.b16 %v358, %v357
      %v390 = vpack.c.b16 %v360, %v359
      %v391 = vpack.c.b16 %v362, %v361
      %v392 = vpack.c.b16 %v364, %v363
      %v393 = vpack.c.b16 %v366, %v365
      %vm421 = vcmask 392192
      %v423 = vsel %vm421, %v255, 0
      %425 = vmatpush.bf16.msra.mxu0 %v374
      %426 = vmatpush.bf16.msra.mxu0 %v373
      %427 = vmatpush.bf16.msra.mxu0 %v372
      %428 = vmatpush.bf16.msra.mxu0 %v371
      %429 = vmatpush.bf16.msra.mxu0 %v370
      %430 = vmatpush.bf16.msra.mxu0 %v369
      %431 = vmatpush.bf16.msra.mxu0 %v368
      %432 = vmatpush.bf16.msra.mxu0 %v367
      %433 = vmatmul.bf16.gmra.mxu0 %v252
      %v434 = vpop.f32.mrf.mxu0
      %v435 = vadd.f32 %v238, %v434
      %v436 = vpop.f32.mrf.mxu0
      %v437 = vadd.f32 %v238, %v436
      %438 = vdwg.mxu0
      %439 = vmatpush.bf16.msra.mxu0 %v382
      %440 = vmatpush.bf16.msra.mxu0 %v381
      %441 = vmatpush.bf16.msra.mxu0 %v380
      %442 = vmatpush.bf16.msra.mxu0 %v379
      %443 = vmatpush.bf16.msra.mxu0 %v378
      %444 = vmatpush.bf16.msra.mxu0 %v377
      %445 = vmatpush.bf16.msra.mxu0 %v376
      %446 = vmatpush.bf16.msra.mxu0 %v375
      %447 = vmatmul.bf16.gmra.mxu0 %v253
      %v448 = vpop.f32.mrf.mxu0
      %v449 = vadd.f32 %v435, %v448
      %v450 = vpop.f32.mrf.mxu0
      %v451 = vadd.f32 %v437, %v450
      %452 = vdwg.mxu0
      %453 = vmatpush.bf16.msra.mxu0 %v390
      %454 = vmatpush.bf16.msra.mxu0 %v389
      %455 = vmatpush.bf16.msra.mxu0 %v388
      %456 = vmatpush.bf16.msra.mxu0 %v387
      %457 = vmatpush.bf16.msra.mxu0 %v386
      %458 = vmatpush.bf16.msra.mxu0 %v385
      %459 = vmatpush.bf16.msra.mxu0 %v384
      %460 = vmatpush.bf16.msra.mxu0 %v383
      %461 = vmatmul.bf16.gmra.mxu0 %v254
      %v462 = vpop.f32.mrf.mxu0
      %v463 = vadd.f32 %v449, %v462
      %v464 = vpop.f32.mrf.mxu0
      %v465 = vadd.f32 %v451, %v464
      %466 = vdwg.mxu0
      %467 = vmatpush.bf16.msra.mxu0 0
      %468 = vmatpush.bf16.msra.mxu0 0
      %469 = vmatpush.bf16.msra.mxu0 0
      %470 = vmatpush.bf16.msra.mxu0 0
      %471 = vmatpush.bf16.msra.mxu0 0
      %472 = vmatpush.bf16.msra.mxu0 %v393
      %473 = vmatpush.bf16.msra.mxu0 %v392
      %474 = vmatpush.bf16.msra.mxu0 %v391
      %475 = vmatmul.bf16.gmra.mxu0 %v423
      %v476 = vpop.f32.mrf.mxu0
      %v477 = vadd.f32 %v463, %v476
      %v478 = vpop.f32.mrf.mxu0
      %v479 = vadd.f32 %v465, %v478
      %480 = vdwg.mxu0
      %v481 = vmax.f32 %v477, 0.0
      %v482 = vmax.f32 %v479, 0.0
      %v483 = vpack.c.bf16 %v481, %v481
      %v484 = vpack.c.bf16 %v482, %v482
      %vm485 = vcmask 781312
      %486 = vst.msk [vmem:[%s175] sm:$0xf] %vm485, %v483
      %487 = vst.msk [vmem:[%s175 + $0x4] sm:$0xf] %vm485, %v484
      %s488 = smul.u32 2, %s14
      %p489 = scmp.lt.s32.totalorder %s488, 3
      %s490 = scalar_select %p489, %s488, 3
      %s491 = smul.addr %s490, 4
      %s492 = scalar_lea.vmem %s3, %s491
      // Predicated region
      $region33: #{conv_stream_pallas.4} parent=31 // pred_check
        %p493 = pneg %p100
      $region34: #{conv_stream_pallas.4} parent=31 // pred_check_branch
        %495 = sbr.rel (%p493) target = $region36
      $region35: #{conv_stream_pallas.4} parent=31 // pred_region
        %s496 = smul.u32 2, %s14
      $region36: #{conv_stream_pallas.4} parent=31 // pred_fallthru
        _
    $region32: #{conv_stream_pallas.4} parent=5 // pred_fallthru
      _
    %p497 = scmp.le.s32.totalorder 2, %s9
    // Predicated region
    $region37: #{conv_stream_pallas.4} parent=5 // pred_check
      %p498 = pneg %p497
    $region38: #{conv_stream_pallas.4} parent=5 // pred_check_branch
      %500 = sbr.rel (%p498) target = $region40
    $region39: #{conv_stream_pallas.4} parent=5 // pred_region
      %s501 = ssub.s32 %s9, 2
      // Predicated region
      $region41: #{conv_stream_pallas.4} parent=39 // pred_check
        %p502 = pneg %p106
      $region42: #{conv_stream_pallas.4} parent=39 // pred_check_branch
        %504 = sbr.rel (%p502) target = $region44
      $region43: #{conv_stream_pallas.4} parent=39 // pred_region
        %s505 = smul.u32 2, %s15
        %p506 = scmp.lt.s32.totalorder %s505, 3
        %s507 = scalar_select %p506, %s505, 3
        %s508 = smul.addr %s507, 4
        %s509 = scalar_lea.vmem %s3, %s508
      $region44: #{conv_stream_pallas.4} parent=39 // pred_fallthru
        _
    $region40: #{conv_stream_pallas.4} parent=5 // pred_fallthru
      _
  $region6: #{conv_stream_pallas.4} parent=0 // loop_footer
    %s13 = sadd.s32 1, %s9
  $region7: #{conv_stream_pallas.4} parent=0 // loop_footer_branch
    %8 = sbr.rel target = $region3
  $region8: #{conv_stream_pallas.4} parent=0 // loop_exit
    _

// kernel: conv_stream_pallas.5
$region0: #{conv_stream_pallas.5}
  #allocation0 [shape = 'u32[]', space=smem, size = 0x4, offset = 0x4, fixed_abs, tag = 'smem constant byte address 0x4 - core index']
  #allocation1 [shape = 'u32[72,128]{1,0:T(1,128)}', space=vmem, size = 0x9000, scoped, tag = 'internal scratch']
  %s0 = inlined_call_operand.vmem [shape: bf16[8,864], index: 0, kind: input, shape index: {}]
  %s1 = inlined_call_operand.vmem [shape: bf16[864,192], index: 1, kind: input, shape index: {}]
  %s2 = inlined_call_operand.vmem [shape: f32[1,192], index: 2, kind: input, shape index: {}]
  %s3 = inlined_call_operand.vmem [shape: bf16[8,192], index: 3, kind: output, shape index: {}]
  %s4 = sld [smem:[#allocation0]]
  $region22: #{conv_stream_pallas.5} parent=0
    _
  %s6 = ssub.s32 1, %s4
  %s7 = scalar_select 0, %s6, %s4
  // Predicated region
  $region2: #{conv_stream_pallas.5} parent=0 // pred_check
    _
  $region3: #{conv_stream_pallas.5} parent=0 // pred_check_branch
    %9 = sbr.rel (0) target = $region5
  $region4: #{conv_stream_pallas.5} parent=0 // pred_region
    _
  $region5: #{conv_stream_pallas.5} parent=0 // pred_fallthru
    _
  // Predicated region
  $region6: #{conv_stream_pallas.5} parent=0 // pred_check
    _
  $region7: #{conv_stream_pallas.5} parent=0 // pred_check_branch
    %11 = sbr.rel (0) target = $region9
  $region8: #{conv_stream_pallas.5} parent=0 // pred_region
    _
  $region9: #{conv_stream_pallas.5} parent=0 // pred_fallthru
    _
  // Predicated region
  $region10: #{conv_stream_pallas.5} parent=0 // pred_check
    _
  $region11: #{conv_stream_pallas.5} parent=0 // pred_check_branch
    %13 = sbr.rel (0) target = $region13
  $region12: #{conv_stream_pallas.5} parent=0 // pred_region
    _
  $region13: #{conv_stream_pallas.5} parent=0 // pred_fallthru
    _
  %v15 = vld [vmem:[%s0] sm:$0xff]
  %v16 = vld [vmem:[%s0 + $0x8] sm:$0xff]
  %v17 = vld [vmem:[%s0 + $0x10] sm:$0xff]
  %v18 = vld [vmem:[%s0 + $0x18] sm:$0xf]
  %v19 = vld [vmem:[%s1] sm:$0xff]
  %v20 = vld [vmem:[%s1 + $0x8] sm:$0xff]
  %v21 = vld [vmem:[%s1 + $0x10] sm:$0xff]
  %v22 = vld [vmem:[%s1 + $0x18] sm:$0xff]
  %v23 = vld [vmem:[%s1 + $0x20] sm:$0xff]
  %v24 = vld [vmem:[%s1 + $0x28] sm:$0xff]
  %v25 = vld [vmem:[%s1 + $0x30] sm:$0xff]
  %v26 = vld [vmem:[%s1 + $0x38] sm:$0xff]
  %v27 = vld [vmem:[%s1 + $0x40] sm:$0xff]
  %v28 = vld [vmem:[%s1 + $0x48] sm:$0xff]
  %v29 = vld [vmem:[%s1 + $0x50] sm:$0xff]
  %v30 = vld [vmem:[%s1 + $0x58] sm:$0xff]
  %v31 = vld [vmem:[%s1 + $0x60] sm:$0xff]
  %v32 = vld [vmem:[%s1 + $0x68] sm:$0xff]
  %v33 = vld [vmem:[%s1 + $0x70] sm:$0xff]
  %v34 = vld [vmem:[%s1 + $0x78] sm:$0xff]
  %v35 = vld [vmem:[%s1 + $0x80] sm:$0xff]
  %v36 = vld [vmem:[%s1 + $0x88] sm:$0xff]
  %v37 = vld [vmem:[%s1 + $0x90] sm:$0xff]
  %v38 = vld [vmem:[%s1 + $0x98] sm:$0xff]
  %v39 = vld [vmem:[%s1 + $0xa0] sm:$0xff]
  %v40 = vld [vmem:[%s1 + $0xa8] sm:$0xff]
  %v41 = vld [vmem:[%s1 + $0xb0] sm:$0xff]
  %v42 = vld [vmem:[%s1 + $0xb8] sm:$0xff]
  %v43 = vld [vmem:[%s1 + $0xc0] sm:$0xff]
  %v44 = vld [vmem:[%s1 + $0xc8] sm:$0xff]
  %v45 = vld [vmem:[%s1 + $0xd0] sm:$0xff]
  %v46 = vld [vmem:[%s1 + $0xd8] sm:$0xff]
  %v47 = vld [vmem:[%s1 + $0xe0] sm:$0xff]
  %v48 = vld [vmem:[%s1 + $0xe8] sm:$0xff]
  %v49 = vld [vmem:[%s1 + $0xf0] sm:$0xff]
  %v50 = vld [vmem:[%s1 + $0xf8] sm:$0xff]
  %v51 = vld [vmem:[%s1 + $0x100] sm:$0xff]
  %v52 = vld [vmem:[%s1 + $0x108] sm:$0xff]
  %v53 = vld [vmem:[%s1 + $0x110] sm:$0xff]
  %v54 = vld [vmem:[%s1 + $0x118] sm:$0xff]
  %v55 = vld [vmem:[%s1 + $0x120] sm:$0xff]
  %v56 = vld [vmem:[%s1 + $0x128] sm:$0xff]
  %v57 = vld [vmem:[%s1 + $0x130] sm:$0xff]
  %v58 = vld [vmem:[%s1 + $0x138] sm:$0xff]
  %v59 = vld [vmem:[%s1 + $0x140] sm:$0xff]
  %v60 = vld [vmem:[%s1 + $0x148] sm:$0xff]
  %v61 = vld [vmem:[%s1 + $0x150] sm:$0xff]
  %v62 = vld [vmem:[%s1 + $0x158] sm:$0xff]
  %v63 = vld [vmem:[%s1 + $0x160] sm:$0xff]
  %v64 = vld [vmem:[%s1 + $0x168] sm:$0xff]
  %v65 = vld [vmem:[%s1 + $0x170] sm:$0xff]
  %v66 = vld [vmem:[%s1 + $0x178] sm:$0xff]
  %v67 = vld [vmem:[%s1 + $0x180] sm:$0xff]
  %v68 = vld [vmem:[%s1 + $0x188] sm:$0xff]
  %v69 = vld [vmem:[%s1 + $0x190] sm:$0xff]
  %v70 = vld [vmem:[%s1 + $0x198] sm:$0xff]
  %v71 = vld [vmem:[%s1 + $0x1a0] sm:$0xff]
  %v72 = vld [vmem:[%s1 + $0x1a8] sm:$0xff]
  %v73 = vld [vmem:[%s1 + $0x1b0] sm:$0xff]
  %v74 = vld [vmem:[%s1 + $0x1b8] sm:$0xff]
  %v75 = vld [vmem:[%s1 + $0x1c0] sm:$0xff]
  %v76 = vld [vmem:[%s1 + $0x1c8] sm:$0xff]
  %v77 = vld [vmem:[%s1 + $0x1d0] sm:$0xff]
  %v78 = vld [vmem:[%s1 + $0x1d8] sm:$0xff]
  %v79 = vld [vmem:[%s1 + $0x1e0] sm:$0xff]
  %v80 = vld [vmem:[%s1 + $0x1e8] sm:$0xff]
  %v81 = vld [vmem:[%s1 + $0x1f0] sm:$0xff]
  %v82 = vld [vmem:[%s1 + $0x1f8] sm:$0xff]
  %v83 = vld [vmem:[%s1 + $0x200] sm:$0xff]
  %v84 = vld [vmem:[%s1 + $0x208] sm:$0xff]
  %v85 = vld [vmem:[%s1 + $0x210] sm:$0xff]
  %v86 = vld [vmem:[%s1 + $0x218] sm:$0xff]
  %v87 = vld [vmem:[%s1 + $0x220] sm:$0xff]
  %v88 = vld [vmem:[%s1 + $0x228] sm:$0xff]
  %v89 = vld [vmem:[%s1 + $0x230] sm:$0xff]
  %v90 = vld [vmem:[%s1 + $0x238] sm:$0xff]
  %v91 = vld [vmem:[%s1 + $0x240] sm:$0xff]
  %v92 = vld [vmem:[%s1 + $0x248] sm:$0xff]
  %v93 = vld [vmem:[%s1 + $0x250] sm:$0xff]
  %v94 = vld [vmem:[%s1 + $0x258] sm:$0xff]
  %v95 = vld [vmem:[%s1 + $0x260] sm:$0xff]
  %v96 = vld [vmem:[%s1 + $0x268] sm:$0xff]
  %v97 = vld [vmem:[%s1 + $0x270] sm:$0xff]
  %v98 = vld [vmem:[%s1 + $0x278] sm:$0xff]
  %v99 = vld [vmem:[%s1 + $0x280] sm:$0xff]
  %v100 = vld [vmem:[%s1 + $0x288] sm:$0xff]
  %v101 = vld [vmem:[%s1 + $0x290] sm:$0xff]
  %v102 = vld [vmem:[%s1 + $0x298] sm:$0xff]
  %v103 = vld [vmem:[%s1 + $0x2a0] sm:$0xff]
  %v104 = vld [vmem:[%s1 + $0x2a8] sm:$0xff]
  %v105 = vld [vmem:[%s1 + $0x2b0] sm:$0xff]
  %v106 = vld [vmem:[%s1 + $0x2b8] sm:$0xff]
  %v107 = vld [vmem:[%s1 + $0x2c0] sm:$0xff]
  %v108 = vld [vmem:[%s1 + $0x2c8] sm:$0xff]
  %v109 = vld [vmem:[%s1 + $0x2d0] sm:$0xff]
  %v110 = vld [vmem:[%s1 + $0x2d8] sm:$0xff]
  %v111 = vld [vmem:[%s1 + $0x2e0] sm:$0xff]
  %v112 = vld [vmem:[%s1 + $0x2e8] sm:$0xff]
  %v113 = vld [vmem:[%s1 + $0x2f0] sm:$0xff]
  %v114 = vld [vmem:[%s1 + $0x2f8] sm:$0xff]
  %v115 = vld [vmem:[%s1 + $0x300] sm:$0xff]
  %v116 = vld [vmem:[%s1 + $0x308] sm:$0xff]
  %v117 = vld [vmem:[%s1 + $0x310] sm:$0xff]
  %v118 = vld [vmem:[%s1 + $0x318] sm:$0xff]
  %v119 = vld [vmem:[%s1 + $0x320] sm:$0xff]
  %v120 = vld [vmem:[%s1 + $0x328] sm:$0xff]
  %v121 = vld [vmem:[%s1 + $0x330] sm:$0xff]
  %v122 = vld [vmem:[%s1 + $0x338] sm:$0xff]
  %v123 = vld [vmem:[%s1 + $0x340] sm:$0xff]
  %v124 = vld [vmem:[%s1 + $0x348] sm:$0xff]
  %v125 = vld [vmem:[%s1 + $0x350] sm:$0xff]
  %v126 = vld [vmem:[%s1 + $0x358] sm:$0xff]
  %v127 = vld [vmem:[%s2] sm:$0x3]
  %v129 = vperm.slane %v127, 0
  %v130 = vperm.slane %v127, 1
  %v137 = vunpack.c.l.b16 %v15
  %v138 = vunpack.c.h.b16 %v15
  %v139 = vunpack.c.l.b16 %v16
  %v140 = vunpack.c.h.b16 %v16
  %v141 = vunpack.c.l.b16 %v17
  %v142 = vunpack.c.h.b16 %v17
  %v143 = vunpack.c.l.b16 %v18
  %v144 = vpack.c.b16 %v137, %v137
  %v145 = vpack.c.b16 %v138, %v138
  %v146 = vpack.c.b16 %v139, %v139
  %v147 = vpack.c.b16 %v140, %v140
  %v148 = vpack.c.b16 %v141, %v141
  %v149 = vpack.c.b16 %v142, %v142
  %v150 = vpack.c.b16 %v143, %v143
  %v265 = vunpack.c.l.b16 %v19
  %v266 = vunpack.c.h.b16 %v19
  %v267 = vunpack.c.l.b16 %v20
  %v268 = vunpack.c.h.b16 %v20
  %v269 = vunpack.c.l.b16 %v21
  %v270 = vunpack.c.h.b16 %v21
  %v271 = vunpack.c.l.b16 %v22
  %v272 = vunpack.c.h.b16 %v22
  %v273 = vunpack.c.l.b16 %v23
  %v274 = vunpack.c.h.b16 %v23
  %v275 = vunpack.c.l.b16 %v24
  %v276 = vunpack.c.h.b16 %v24
  %v277 = vunpack.c.l.b16 %v25
  %v278 = vunpack.c.h.b16 %v25
  %v279 = vunpack.c.l.b16 %v26
  %v280 = vunpack.c.h.b16 %v26
  %v281 = vunpack.c.l.b16 %v27
  %v282 = vunpack.c.h.b16 %v27
  %v283 = vunpack.c.l.b16 %v28
  %v284 = vunpack.c.h.b16 %v28
  %v285 = vunpack.c.l.b16 %v29
  %v286 = vunpack.c.h.b16 %v29
  %v287 = vunpack.c.l.b16 %v30
  %v288 = vunpack.c.h.b16 %v30
  %v289 = vunpack.c.l.b16 %v31
  %v290 = vunpack.c.h.b16 %v31
  %v291 = vunpack.c.l.b16 %v32
  %v292 = vunpack.c.h.b16 %v32
  %v293 = vunpack.c.l.b16 %v33
  %v294 = vunpack.c.h.b16 %v33
  %v295 = vunpack.c.l.b16 %v34
  %v296 = vunpack.c.h.b16 %v34
  %v297 = vunpack.c.l.b16 %v35
  %v298 = vunpack.c.h.b16 %v35
  %v299 = vunpack.c.l.b16 %v36
  %v300 = vunpack.c.h.b16 %v36
  %v301 = vunpack.c.l.b16 %v37
  %v302 = vunpack.c.h.b16 %v37
  %v303 = vunpack.c.l.b16 %v38
  %v304 = vunpack.c.h.b16 %v38
  %v305 = vunpack.c.l.b16 %v39
  %v306 = vunpack.c.h.b16 %v39
  %v307 = vunpack.c.l.b16 %v40
  %v308 = vunpack.c.h.b16 %v40
  %v309 = vunpack.c.l.b16 %v41
  %v310 = vunpack.c.h.b16 %v41
  %v311 = vunpack.c.l.b16 %v42
  %v312 = vunpack.c.h.b16 %v42
  %v313 = vunpack.c.l.b16 %v43
  %v314 = vunpack.c.h.b16 %v43
  %v315 = vunpack.c.l.b16 %v44
  %v316 = vunpack.c.h.b16 %v44
  %v317 = vunpack.c.l.b16 %v45
  %v318 = vunpack.c.h.b16 %v45
  %v319 = vunpack.c.l.b16 %v46
  %v320 = vunpack.c.h.b16 %v46
  %v321 = vunpack.c.l.b16 %v47
  %v322 = vunpack.c.h.b16 %v47
  %v323 = vunpack.c.l.b16 %v48
  %v324 = vunpack.c.h.b16 %v48
  %v325 = vunpack.c.l.b16 %v49
  %v326 = vunpack.c.h.b16 %v49
  %v327 = vunpack.c.l.b16 %v50
  %v328 = vunpack.c.h.b16 %v50
  %v329 = vunpack.c.l.b16 %v51
  %v330 = vunpack.c.h.b16 %v51
  %v331 = vunpack.c.l.b16 %v52
  %v332 = vunpack.c.h.b16 %v52
  %v333 = vunpack.c.l.b16 %v53
  %v334 = vunpack.c.h.b16 %v53
  %v335 = vunpack.c.l.b16 %v54
  %v336 = vunpack.c.h.b16 %v54
  %v337 = vunpack.c.l.b16 %v55
  %v338 = vunpack.c.h.b16 %v55
  %v339 = vunpack.c.l.b16 %v56
  %v340 = vunpack.c.h.b16 %v56
  %v341 = vunpack.c.l.b16 %v57
  %v342 = vunpack.c.h.b16 %v57
  %v343 = vunpack.c.l.b16 %v58
  %v344 = vunpack.c.h.b16 %v58
  %v345 = vunpack.c.l.b16 %v59
  %v346 = vunpack.c.h.b16 %v59
  %v347 = vunpack.c.l.b16 %v60
  %v348 = vunpack.c.h.b16 %v60
  %v349 = vunpack.c.l.b16 %v61
  %v350 = vunpack.c.h.b16 %v61
  %v351 = vunpack.c.l.b16 %v62
  %v352 = vunpack.c.h.b16 %v62
  %v353 = vunpack.c.l.b16 %v63
  %v354 = vunpack.c.h.b16 %v63
  %v355 = vunpack.c.l.b16 %v64
  %v356 = vunpack.c.h.b16 %v64
  %v357 = vunpack.c.l.b16 %v65
  %v358 = vunpack.c.h.b16 %v65
  %v359 = vunpack.c.l.b16 %v66
  %v360 = vunpack.c.h.b16 %v66
  %v361 = vunpack.c.l.b16 %v67
  %v362 = vunpack.c.h.b16 %v67
  %v363 = vunpack.c.l.b16 %v68
  %v364 = vunpack.c.h.b16 %v68
  %v365 = vunpack.c.l.b16 %v69
  %v366 = vunpack.c.h.b16 %v69
  %v367 = vunpack.c.l.b16 %v70
  %v368 = vunpack.c.h.b16 %v70
  %v369 = vunpack.c.l.b16 %v71
  %v370 = vunpack.c.h.b16 %v71
  %v371 = vunpack.c.l.b16 %v72
  %v372 = vunpack.c.h.b16 %v72
  %v373 = vunpack.c.l.b16 %v73
  %v374 = vunpack.c.h.b16 %v73
  %v375 = vunpack.c.l.b16 %v74
  %v376 = vunpack.c.h.b16 %v74
  %v377 = vunpack.c.l.b16 %v75
  %v378 = vunpack.c.h.b16 %v75
  %v379 = vunpack.c.l.b16 %v76
  %v380 = vunpack.c.h.b16 %v76
  %v381 = vunpack.c.l.b16 %v77
  %v382 = vunpack.c.h.b16 %v77
  %v383 = vunpack.c.l.b16 %v78
  %v384 = vunpack.c.h.b16 %v78
  %v385 = vunpack.c.l.b16 %v79
  %v386 = vunpack.c.h.b16 %v79
  %v387 = vunpack.c.l.b16 %v80
  %v388 = vunpack.c.h.b16 %v80
  %v389 = vunpack.c.l.b16 %v81
  %v390 = vunpack.c.h.b16 %v81
  %v391 = vunpack.c.l.b16 %v82
  %v392 = vunpack.c.h.b16 %v82
  %v393 = vunpack.c.l.b16 %v83
  %v394 = vunpack.c.h.b16 %v83
  %v395 = vunpack.c.l.b16 %v84
  %v396 = vunpack.c.h.b16 %v84
  %v397 = vunpack.c.l.b16 %v85
  %v398 = vunpack.c.h.b16 %v85
  %v399 = vunpack.c.l.b16 %v86
  %v400 = vunpack.c.h.b16 %v86
  %v401 = vunpack.c.l.b16 %v87
  %v402 = vunpack.c.h.b16 %v87
  %v403 = vunpack.c.l.b16 %v88
  %v404 = vunpack.c.h.b16 %v88
  %v405 = vunpack.c.l.b16 %v89
  %v406 = vunpack.c.h.b16 %v89
  %v407 = vunpack.c.l.b16 %v90
  %v408 = vunpack.c.h.b16 %v90
  %v409 = vunpack.c.l.b16 %v91
  %v410 = vunpack.c.h.b16 %v91
  %v411 = vunpack.c.l.b16 %v92
  %v412 = vunpack.c.h.b16 %v92
  %v413 = vunpack.c.l.b16 %v93
  %v414 = vunpack.c.h.b16 %v93
  %v415 = vunpack.c.l.b16 %v94
  %v416 = vunpack.c.h.b16 %v94
  %v417 = vunpack.c.l.b16 %v95
  %v418 = vunpack.c.h.b16 %v95
  %v419 = vunpack.c.l.b16 %v96
  %v420 = vunpack.c.h.b16 %v96
  %v421 = vunpack.c.l.b16 %v97
  %v422 = vunpack.c.h.b16 %v97
  %v423 = vunpack.c.l.b16 %v98
  %v424 = vunpack.c.h.b16 %v98
  %v425 = vunpack.c.l.b16 %v99
  %v426 = vunpack.c.h.b16 %v99
  %v427 = vunpack.c.l.b16 %v100
  %v428 = vunpack.c.h.b16 %v100
  %v429 = vunpack.c.l.b16 %v101
  %v430 = vunpack.c.h.b16 %v101
  %v431 = vunpack.c.l.b16 %v102
  %v432 = vunpack.c.h.b16 %v102
  %v433 = vunpack.c.l.b16 %v103
  %v434 = vunpack.c.h.b16 %v103
  %v435 = vunpack.c.l.b16 %v104
  %v436 = vunpack.c.h.b16 %v104
  %v437 = vunpack.c.l.b16 %v105
  %v438 = vunpack.c.h.b16 %v105
  %v439 = vunpack.c.l.b16 %v106
  %v440 = vunpack.c.h.b16 %v106
  %v441 = vunpack.c.l.b16 %v107
  %v442 = vunpack.c.h.b16 %v107
  %v443 = vunpack.c.l.b16 %v108
  %v444 = vunpack.c.h.b16 %v108
  %v445 = vunpack.c.l.b16 %v109
  %v446 = vunpack.c.h.b16 %v109
  %v447 = vunpack.c.l.b16 %v110
  %v448 = vunpack.c.h.b16 %v110
  %v449 = vunpack.c.l.b16 %v111
  %v450 = vunpack.c.h.b16 %v111
  %v451 = vunpack.c.l.b16 %v112
  %v452 = vunpack.c.h.b16 %v112
  %v453 = vunpack.c.l.b16 %v113
  %v454 = vunpack.c.h.b16 %v113
  %v455 = vunpack.c.l.b16 %v114
  %v456 = vunpack.c.h.b16 %v114
  %v457 = vunpack.c.l.b16 %v115
  %v458 = vunpack.c.h.b16 %v115
  %v459 = vunpack.c.l.b16 %v116
  %v460 = vunpack.c.h.b16 %v116
  %v461 = vunpack.c.l.b16 %v117
  %v462 = vunpack.c.h.b16 %v117
  %v463 = vunpack.c.l.b16 %v118
  %v464 = vunpack.c.h.b16 %v118
  %v465 = vunpack.c.l.b16 %v119
  %v466 = vunpack.c.h.b16 %v119
  %v467 = vunpack.c.l.b16 %v120
  %v468 = vunpack.c.h.b16 %v120
  %v469 = vunpack.c.l.b16 %v121
  %v470 = vunpack.c.h.b16 %v121
  %v471 = vunpack.c.l.b16 %v122
  %v472 = vunpack.c.h.b16 %v122
  %v473 = vunpack.c.l.b16 %v123
  %v474 = vunpack.c.h.b16 %v123
  %v475 = vunpack.c.l.b16 %v124
  %v476 = vunpack.c.h.b16 %v124
  %v477 = vunpack.c.l.b16 %v125
  %v478 = vunpack.c.h.b16 %v125
  %v479 = vunpack.c.l.b16 %v126
  %v480 = vunpack.c.h.b16 %v126
  %v481 = vpack.c.b16 %v267, %v265
  %v482 = vpack.c.b16 %v268, %v266
  %v483 = vpack.c.b16 %v271, %v269
  %v484 = vpack.c.b16 %v272, %v270
  %v485 = vpack.c.b16 %v275, %v273
  %v486 = vpack.c.b16 %v276, %v274
  %v487 = vpack.c.b16 %v279, %v277
  %v488 = vpack.c.b16 %v280, %v278
  %v489 = vpack.c.b16 %v283, %v281
  %v490 = vpack.c.b16 %v284, %v282
  %v491 = vpack.c.b16 %v287, %v285
  %v492 = vpack.c.b16 %v288, %v286
  %v493 = vpack.c.b16 %v291, %v289
  %v494 = vpack.c.b16 %v292, %v290
  %v495 = vpack.c.b16 %v295, %v293
  %v496 = vpack.c.b16 %v296, %v294
  %v497 = vpack.c.b16 %v299, %v297
  %v498 = vpack.c.b16 %v300, %v298
  %v499 = vpack.c.b16 %v303, %v301
  %v500 = vpack.c.b16 %v304, %v302
  %v501 = vpack.c.b16 %v307, %v305
  %v502 = vpack.c.b16 %v308, %v306
  %v503 = vpack.c.b16 %v311, %v309
  %v504 = vpack.c.b16 %v312, %v310
  %v505 = vpack.c.b16 %v315, %v313
  %v506 = vpack.c.b16 %v316, %v314
  %v507 = vpack.c.b16 %v319, %v317
  %v508 = vpack.c.b16 %v320, %v318
  %v509 = vpack.c.b16 %v323, %v321
  %v510 = vpack.c.b16 %v324, %v322
  %v511 = vpack.c.b16 %v327, %v325
  %v512 = vpack.c.b16 %v328, %v326
  %v513 = vpack.c.b16 %v331, %v329
  %v514 = vpack.c.b16 %v332, %v330
  %v515 = vpack.c.b16 %v335, %v333
  %v516 = vpack.c.b16 %v336, %v334
  %v517 = vpack.c.b16 %v339, %v337
  %v518 = vpack.c.b16 %v340, %v338
  %v519 = vpack.c.b16 %v343, %v341
  %v520 = vpack.c.b16 %v344, %v342
  %v521 = vpack.c.b16 %v347, %v345
  %v522 = vpack.c.b16 %v348, %v346
  %v523 = vpack.c.b16 %v351, %v349
  %v524 = vpack.c.b16 %v352, %v350
  %v525 = vpack.c.b16 %v355, %v353
  %v526 = vpack.c.b16 %v356, %v354
  %v527 = vpack.c.b16 %v359, %v357
  %v528 = vpack.c.b16 %v360, %v358
  %v529 = vpack.c.b16 %v363, %v361
  %v530 = vpack.c.b16 %v364, %v362
  %v531 = vpack.c.b16 %v367, %v365
  %v532 = vpack.c.b16 %v368, %v366
  %v533 = vpack.c.b16 %v371, %v369
  %v534 = vpack.c.b16 %v372, %v370
  %v535 = vpack.c.b16 %v375, %v373
  %v536 = vpack.c.b16 %v376, %v374
  %v537 = vpack.c.b16 %v379, %v377
  %v538 = vpack.c.b16 %v380, %v378
  %v539 = vpack.c.b16 %v383, %v381
  %v540 = vpack.c.b16 %v384, %v382
  %v541 = vpack.c.b16 %v387, %v385
  %v542 = vpack.c.b16 %v388, %v386
  %v543 = vpack.c.b16 %v391, %v389
  %v544 = vpack.c.b16 %v392, %v390
  %v545 = vpack.c.b16 %v395, %v393
  %v546 = vpack.c.b16 %v396, %v394
  %v547 = vpack.c.b16 %v399, %v397
  %v548 = vpack.c.b16 %v400, %v398
  %v549 = vpack.c.b16 %v403, %v401
  %v550 = vpack.c.b16 %v404, %v402
  %v551 = vpack.c.b16 %v407, %v405
  %v552 = vpack.c.b16 %v408, %v406
  %v553 = vpack.c.b16 %v411, %v409
  %v554 = vpack.c.b16 %v412, %v410
  %v555 = vpack.c.b16 %v415, %v413
  %v556 = vpack.c.b16 %v416, %v414
  %v557 = vpack.c.b16 %v419, %v417
  %v558 = vpack.c.b16 %v420, %v418
  %v559 = vpack.c.b16 %v423, %v421
  %v560 = vpack.c.b16 %v424, %v422
  %v561 = vpack.c.b16 %v427, %v425
  %v562 = vpack.c.b16 %v428, %v426
  %v563 = vpack.c.b16 %v431, %v429
  %v564 = vpack.c.b16 %v432, %v430
  %v565 = vpack.c.b16 %v435, %v433
  %v566 = vpack.c.b16 %v436, %v434
  %v567 = vpack.c.b16 %v439, %v437
  %v568 = vpack.c.b16 %v440, %v438
  %v569 = vpack.c.b16 %v443, %v441
  %v570 = vpack.c.b16 %v444, %v442
  %v571 = vpack.c.b16 %v447, %v445
  %v572 = vpack.c.b16 %v448, %v446
  %v573 = vpack.c.b16 %v451, %v449
  %v574 = vpack.c.b16 %v452, %v450
  %v575 = vpack.c.b16 %v455, %v453
  %v576 = vpack.c.b16 %v456, %v454
  %v577 = vpack.c.b16 %v459, %v457
  %v578 = vpack.c.b16 %v460, %v458
  %v579 = vpack.c.b16 %v463, %v461
  %v580 = vpack.c.b16 %v464, %v462
  %v581 = vpack.c.b16 %v467, %v465
  %v582 = vpack.c.b16 %v468, %v466
  %v583 = vpack.c.b16 %v471, %v469
  %v584 = vpack.c.b16 %v472, %v470
  %v585 = vpack.c.b16 %v475, %v473
  %v586 = vpack.c.b16 %v476, %v474
  %v587 = vpack.c.b16 %v479, %v477
  %v588 = vpack.c.b16 %v480, %v478
  %vm697 = vcmask 785408
  %v699 = vsel %vm697, %v150, 0
  %701 = vmatpush.bf16.msra.mxu0 %v495
  %702 = vmatpush.bf16.msra.mxu0 %v493
  %703 = vmatpush.bf16.msra.mxu0 %v491
  %704 = vmatpush.bf16.msra.mxu0 %v489
  %705 = vmatpush.bf16.msra.mxu0 %v487
  %706 = vmatpush.bf16.msra.mxu0 %v485
  %707 = vmatpush.bf16.msra.mxu0 %v483
  %708 = vmatpush.bf16.msra.mxu0 %v481
  %709 = vmatmul.bf16.gmra.mxu0 %v144
  %v710 = vpop.f32.mrf.mxu0
  %v711 = vadd.f32 %v129, %v710
  %v712 = vpop.f32.mrf.mxu0
  %713 = vdwg.mxu0
  %714 = vmatpush.bf16.msra.mxu0 %v511
  %715 = vmatpush.bf16.msra.mxu0 %v509
  %716 = vmatpush.bf16.msra.mxu0 %v507
  %717 = vmatpush.bf16.msra.mxu0 %v505
  %718 = vmatpush.bf16.msra.mxu0 %v503
  %719 = vmatpush.bf16.msra.mxu0 %v501
  %720 = vmatpush.bf16.msra.mxu0 %v499
  %721 = vmatpush.bf16.msra.mxu0 %v497
  %722 = vmatmul.bf16.gmra.mxu0 %v145
  %v723 = vpop.f32.mrf.mxu0
  %v724 = vadd.f32 %v711, %v723
  %v725 = vpop.f32.mrf.mxu0
  %726 = vdwg.mxu0
  %727 = vmatpush.bf16.msra.mxu0 %v527
  %728 = vmatpush.bf16.msra.mxu0 %v525
  %729 = vmatpush.bf16.msra.mxu0 %v523
  %730 = vmatpush.bf16.msra.mxu0 %v521
  %731 = vmatpush.bf16.msra.mxu0 %v519
  %732 = vmatpush.bf16.msra.mxu0 %v517
  %733 = vmatpush.bf16.msra.mxu0 %v515
  %734 = vmatpush.bf16.msra.mxu0 %v513
  %735 = vmatmul.bf16.gmra.mxu0 %v146
  %v736 = vpop.f32.mrf.mxu0
  %v737 = vadd.f32 %v724, %v736
  %v738 = vpop.f32.mrf.mxu0
  %739 = vdwg.mxu0
  %740 = vmatpush.bf16.msra.mxu0 %v543
  %741 = vmatpush.bf16.msra.mxu0 %v541
  %742 = vmatpush.bf16.msra.mxu0 %v539
  %743 = vmatpush.bf16.msra.mxu0 %v537
  %744 = vmatpush.bf16.msra.mxu0 %v535
  %745 = vmatpush.bf16.msra.mxu0 %v533
  %746 = vmatpush.bf16.msra.mxu0 %v531
  %747 = vmatpush.bf16.msra.mxu0 %v529
  %748 = vmatmul.bf16.gmra.mxu0 %v147
  %v749 = vpop.f32.mrf.mxu0
  %v750 = vadd.f32 %v737, %v749
  %v751 = vpop.f32.mrf.mxu0
  %752 = vdwg.mxu0
  %753 = vmatpush.bf16.msra.mxu0 %v559
  %754 = vmatpush.bf16.msra.mxu0 %v557
  %755 = vmatpush.bf16.msra.mxu0 %v555
  %756 = vmatpush.bf16.msra.mxu0 %v553
  %757 = vmatpush.bf16.msra.mxu0 %v551
  %758 = vmatpush.bf16.msra.mxu0 %v549
  %759 = vmatpush.bf16.msra.mxu0 %v547
  %760 = vmatpush.bf16.msra.mxu0 %v545
  %761 = vmatmul.bf16.gmra.mxu0 %v148
  %v762 = vpop.f32.mrf.mxu0
  %v763 = vadd.f32 %v750, %v762
  %v764 = vpop.f32.mrf.mxu0
  %765 = vdwg.mxu0
  %766 = vmatpush.bf16.msra.mxu0 %v575
  %767 = vmatpush.bf16.msra.mxu0 %v573
  %768 = vmatpush.bf16.msra.mxu0 %v571
  %769 = vmatpush.bf16.msra.mxu0 %v569
  %770 = vmatpush.bf16.msra.mxu0 %v567
  %771 = vmatpush.bf16.msra.mxu0 %v565
  %772 = vmatpush.bf16.msra.mxu0 %v563
  %773 = vmatpush.bf16.msra.mxu0 %v561
  %774 = vmatmul.bf16.gmra.mxu0 %v149
  %v775 = vpop.f32.mrf.mxu0
  %v776 = vadd.f32 %v763, %v775
  %v777 = vpop.f32.mrf.mxu0
  %778 = vdwg.mxu0
  %779 = vmatpush.bf16.msra.mxu0 0
  %780 = vmatpush.bf16.msra.mxu0 0
  %781 = vmatpush.bf16.msra.mxu0 %v587
  %782 = vmatpush.bf16.msra.mxu0 %v585
  %783 = vmatpush.bf16.msra.mxu0 %v583
  %784 = vmatpush.bf16.msra.mxu0 %v581
  %785 = vmatpush.bf16.msra.mxu0 %v579
  %786 = vmatpush.bf16.msra.mxu0 %v577
  %787 = vmatmul.bf16.gmra.mxu0 %v699
  %v788 = vpop.f32.mrf.mxu0
  %v789 = vadd.f32 %v776, %v788
  %v790 = vpop.f32.mrf.mxu0
  %791 = vdwg.mxu0
  %792 = vmatpush.bf16.msra.mxu0 %v496
  %793 = vmatpush.bf16.msra.mxu0 %v494
  %794 = vmatpush.bf16.msra.mxu0 %v492
  %795 = vmatpush.bf16.msra.mxu0 %v490
  %796 = vmatpush.bf16.msra.mxu0 %v488
  %797 = vmatpush.bf16.msra.mxu0 %v486
  %798 = vmatpush.bf16.msra.mxu0 %v484
  %799 = vmatpush.bf16.msra.mxu0 %v482
  %800 = vmatmul.bf16.gmra.mxu0 %v144
  %v801 = vpop.f32.mrf.mxu0
  %v802 = vadd.f32 %v130, %v801
  %v803 = vpop.f32.mrf.mxu0
  %804 = vdwg.mxu0
  %805 = vmatpush.bf16.msra.mxu0 %v512
  %806 = vmatpush.bf16.msra.mxu0 %v510
  %807 = vmatpush.bf16.msra.mxu0 %v508
  %808 = vmatpush.bf16.msra.mxu0 %v506
  %809 = vmatpush.bf16.msra.mxu0 %v504
  %810 = vmatpush.bf16.msra.mxu0 %v502
  %811 = vmatpush.bf16.msra.mxu0 %v500
  %812 = vmatpush.bf16.msra.mxu0 %v498
  %813 = vmatmul.bf16.gmra.mxu0 %v145
  %v814 = vpop.f32.mrf.mxu0
  %v815 = vadd.f32 %v802, %v814
  %v816 = vpop.f32.mrf.mxu0
  %817 = vdwg.mxu0
  %818 = vmatpush.bf16.msra.mxu0 %v528
  %819 = vmatpush.bf16.msra.mxu0 %v526
  %820 = vmatpush.bf16.msra.mxu0 %v524
  %821 = vmatpush.bf16.msra.mxu0 %v522
  %822 = vmatpush.bf16.msra.mxu0 %v520
  %823 = vmatpush.bf16.msra.mxu0 %v518
  %824 = vmatpush.bf16.msra.mxu0 %v516
  %825 = vmatpush.bf16.msra.mxu0 %v514
  %826 = vmatmul.bf16.gmra.mxu0 %v146
  %v827 = vpop.f32.mrf.mxu0
  %v828 = vadd.f32 %v815, %v827
  %v829 = vpop.f32.mrf.mxu0
  %830 = vdwg.mxu0
  %831 = vmatpush.bf16.msra.mxu0 %v544
  %832 = vmatpush.bf16.msra.mxu0 %v542
  %833 = vmatpush.bf16.msra.mxu0 %v540
  %834 = vmatpush.bf16.msra.mxu0 %v538
  %835 = vmatpush.bf16.msra.mxu0 %v536
  %836 = vmatpush.bf16.msra.mxu0 %v534
  %837 = vmatpush.bf16.msra.mxu0 %v532
  %838 = vmatpush.bf16.msra.mxu0 %v530
  %839 = vmatmul.bf16.gmra.mxu0 %v147
  %v840 = vpop.f32.mrf.mxu0
  %v841 = vadd.f32 %v828, %v840
  %v842 = vpop.f32.mrf.mxu0
  %843 = vdwg.mxu0
  %844 = vmatpush.bf16.msra.mxu0 %v560
  %845 = vmatpush.bf16.msra.mxu0 %v558
  %846 = vmatpush.bf16.msra.mxu0 %v556
  %847 = vmatpush.bf16.msra.mxu0 %v554
  %848 = vmatpush.bf16.msra.mxu0 %v552
  %849 = vmatpush.bf16.msra.mxu0 %v550
  %850 = vmatpush.bf16.msra.mxu0 %v548
  %851 = vmatpush.bf16.msra.mxu0 %v546
  %852 = vmatmul.bf16.gmra.mxu0 %v148
  %v853 = vpop.f32.mrf.mxu0
  %v854 = vadd.f32 %v841, %v853
  %v855 = vpop.f32.mrf.mxu0
  %856 = vdwg.mxu0
  %857 = vmatpush.bf16.msra.mxu0 %v576
  %858 = vmatpush.bf16.msra.mxu0 %v574
  %859 = vmatpush.bf16.msra.mxu0 %v572
  %860 = vmatpush.bf16.msra.mxu0 %v570
  %861 = vmatpush.bf16.msra.mxu0 %v568
  %862 = vmatpush.bf16.msra.mxu0 %v566
  %863 = vmatpush.bf16.msra.mxu0 %v564
  %864 = vmatpush.bf16.msra.mxu0 %v562
  %865 = vmatmul.bf16.gmra.mxu0 %v149
  %v866 = vpop.f32.mrf.mxu0
  %v867 = vadd.f32 %v854, %v866
  %v868 = vpop.f32.mrf.mxu0
  %869 = vdwg.mxu0
  %870 = vmatpush.bf16.msra.mxu0 0
  %871 = vmatpush.bf16.msra.mxu0 0
  %872 = vmatpush.bf16.msra.mxu0 %v588
  %873 = vmatpush.bf16.msra.mxu0 %v586
  %874 = vmatpush.bf16.msra.mxu0 %v584
  %875 = vmatpush.bf16.msra.mxu0 %v582
  %876 = vmatpush.bf16.msra.mxu0 %v580
  %877 = vmatpush.bf16.msra.mxu0 %v578
  %878 = vmatmul.bf16.gmra.mxu0 %v699
  %v879 = vpop.f32.mrf.mxu0
  %v880 = vadd.f32 %v867, %v879
  %v881 = vpop.f32.mrf.mxu0
  %882 = vdwg.mxu0
  %v883 = vmax.f32 %v789, 0.0
  %v884 = vmax.f32 %v880, 0.0
  %v885 = vpack.c.bf16 %v884, %v883
  %vm886 = vcmask 1043456
  %vm887 = vcmask 523268
  %vm888 = vmor %vm887, %vm886
  %889 = vst.msk [vmem:[%s3] sm:$0xff] %vm888, %v885
  // Predicated region
  $region14: #{conv_stream_pallas.5} parent=0 // pred_check
    _
  $region15: #{conv_stream_pallas.5} parent=0 // pred_check_branch
    %891 = sbr.rel (0) target = $region17
  $region16: #{conv_stream_pallas.5} parent=0 // pred_region
    _
  $region17: #{conv_stream_pallas.5} parent=0 // pred_fallthru
    _
  // Predicated region
  $region18: #{conv_stream_pallas.5} parent=0 // pred_check
    _
  $region19: #{conv_stream_pallas.5} parent=0 // pred_check_branch
    %893 = sbr.rel (0) target = $region21
  $region20: #{conv_stream_pallas.5} parent=0 // pred_region
    _
  $region21: #{conv_stream_pallas.5} parent=0 // pred_fallthru
    _

</llo_original>
